<compile_context>
chip_gen: v7x
topology: tpu7x:2x2x1
jax: 0.10.0
libtpu: 0.0.40
codegen_flags: <defaults>
</compile_context>

<pallas_src>
import functools
import numpy as np
import jax
import jax.numpy as jnp
from jax.experimental import pallas as pl
from jax.experimental.pallas import tpu as pltpu


def _ru(x, m):
    return ((x + m - 1) // m) * m


# ---------------------------------------------------------------------------
# Kernel 1: fused matmul (+ per-column scale/bias/ReLU)
# Used for: stem 3x3-s2 conv (im2col), sub-pixel deconv phases, pred+edge heads.
# ---------------------------------------------------------------------------
def _mm_kernel(x_ref, w_ref, s_ref, b_ref, o_ref, *, relu):
    acc = jnp.dot(x_ref[0], w_ref[0], preferred_element_type=jnp.float32)
    acc = acc * s_ref[0] + b_ref[0]
    if relu:
        acc = jnp.maximum(acc, 0.0)
    o_ref[0] = acc.astype(o_ref.dtype)


@functools.partial(jax.jit, static_argnames=("relu", "out_dtype"))
def fused_matmul(x3, w3, s3, b3, *, relu, out_dtype=jnp.bfloat16):
    """x3: (G, M, K) bf16, w3: (G, K, N) bf16, s3/b3: (G, 1, N) f32."""
    G, M, K = x3.shape
    N = w3.shape[2]
    Mp = _ru(M, 8)
    TM = Mp if Mp <= 512 else 512           # adaptive row tile (no padding tiny M to 128)
    Mp = _ru(Mp, TM)
    if Mp != M:
        x3 = jnp.pad(x3, ((0, 0), (0, Mp - M), (0, 0)))
    out = pl.pallas_call(
        functools.partial(_mm_kernel, relu=relu),
        out_shape=jax.ShapeDtypeStruct((G, Mp, N), out_dtype),
        grid=(G, Mp // TM),
        in_specs=[
            pl.BlockSpec((1, TM, K), lambda g, m: (g, m, 0)),
            pl.BlockSpec((1, K, N), lambda g, m: (g, 0, 0)),
            pl.BlockSpec((1, 1, N), lambda g, m: (g, 0, 0)),
            pl.BlockSpec((1, 1, N), lambda g, m: (g, 0, 0)),
        ],
        out_specs=pl.BlockSpec((1, TM, N), lambda g, m: (g, m, 0)),
        compiler_params=pltpu.CompilerParams(
            dimension_semantics=("parallel", "parallel")),
    )(x3, w3, s3, b3)
    return out[:, :M]


# ---------------------------------------------------------------------------
# Kernel 2: fused chain of stride-1 InvertedResiduals (pw1 + dw3x3 + pw2 [+res]) x nblk.
# The running activation and the expanded hidden tensor stay in VMEM for the whole chain.
# ---------------------------------------------------------------------------
def _ir_s1_chain_kernel(x_ref, w1_ref, s1_ref, b1_ref, wd_ref, sd_ref, bd_ref,
                        w2_ref, s2_ref, b2_ref, o_ref, hp_ref, g2_ref,
                        *, H, W, nblk, use_res):
    xv = x_ref[0].astype(jnp.float32)                               # (H*W, Cin) f32
    for blk in range(nblk):
        # pointwise expand (MXU, bf16 in / f32 acc) + BN + ReLU
        h = jnp.dot(xv.astype(jnp.bfloat16), w1_ref[blk],
                    preferred_element_type=jnp.float32)
        h = jnp.maximum(h * s1_ref[blk] + b1_ref[blk], 0.0)         # (H*W, Chid) f32
        # scatter into the zero-padded spatial scratch (halo of 1)
        hp_ref[...] = jnp.zeros(hp_ref.shape, jnp.float32)
        for r in range(H):
            hp_ref[1 + r, 1:W + 1, :] = h[r * W:(r + 1) * W, :]
        # depthwise 3x3, stride 1 (f32 on the VPU)
        wd = wd_ref[blk]                                            # (9, Chid) f32
        acc = hp_ref[0:H, 0:W, :] * wd[0:1, :]
        for k in range(1, 9):
            ky, kx = divmod(k, 3)
            acc = acc + hp_ref[ky:ky + H, kx:kx + W, :] * wd[k:k + 1, :]
        acc = jnp.maximum(acc * sd_ref[blk] + bd_ref[blk], 0.0)
        accb = acc.astype(jnp.bfloat16)
        for r in range(H):
            g2_ref[r * W:(r + 1) * W, :] = accb[r]
        # pointwise project + BN (+ residual)
        y = jnp.dot(g2_ref[...], w2_ref[blk], preferred_element_type=jnp.float32)
        y = y * s2_ref[blk] + b2_ref[blk]
        if use_res:
            y = y + xv
        xv = y
    o_ref[0] = xv.astype(o_ref.dtype)


# ---------------------------------------------------------------------------
# Kernel 3: fused InvertedResidual, stride 2.
# The input is pre-split (in XLA) into its 4 spatial parity phases so the stride-2
# depthwise output is computed directly (no 4x wasted work, no strided loads).
# ---------------------------------------------------------------------------
def _ir_s2_kernel(xee_ref, xeo_ref, xoe_ref, xoo_ref,
                  w1_ref, s1_ref, b1_ref, wd_ref, sd_ref, bd_ref,
                  w2_ref, s2_ref, b2_ref, o_ref,
                  pee_ref, peo_ref, poe_ref, poo_ref, g2_ref, *, Ho, Wo):
    def expand(xr):
        hh = jnp.dot(xr[0], w1_ref[...], preferred_element_type=jnp.float32)
        return jnp.maximum(hh * s1_ref[...] + b1_ref[...], 0.0)     # (Ho*Wo, Chid)

    h_ee = expand(xee_ref)
    h_eo = expand(xeo_ref)
    h_oe = expand(xoe_ref)
    h_oo = expand(xoo_ref)

    # zero-pad only where a tap can fall outside (odd-row / odd-col phases)
    peo_ref[...] = jnp.zeros(peo_ref.shape, jnp.float32)
    poe_ref[...] = jnp.zeros(poe_ref.shape, jnp.float32)
    poo_ref[...] = jnp.zeros(poo_ref.shape, jnp.float32)
    for r in range(Ho):
        pee_ref[r, :, :] = h_ee[r * Wo:(r + 1) * Wo, :]
        peo_ref[r, 1:Wo + 1, :] = h_eo[r * Wo:(r + 1) * Wo, :]
        poe_ref[r + 1, :, :] = h_oe[r * Wo:(r + 1) * Wo, :]
        poo_ref[r + 1, 1:Wo + 1, :] = h_oo[r * Wo:(r + 1) * Wo, :]

    wd = wd_ref[...]                                                # (9, Chid) f32

    def wt(k):
        return wd[k:k + 1, :]

    # out(i,j) = sum_{ky,kx} h[2i-1+ky, 2j-1+kx] * w[ky,kx]  (stride-2 taps by parity)
    acc = (wt(0) * poo_ref[0:Ho, 0:Wo, :] + wt(1) * poe_ref[0:Ho, 0:Wo, :]
           + wt(2) * poo_ref[0:Ho, 1:Wo + 1, :]
           + wt(3) * peo_ref[0:Ho, 0:Wo, :] + wt(4) * pee_ref[0:Ho, 0:Wo, :]
           + wt(5) * peo_ref[0:Ho, 1:Wo + 1, :]
           + wt(6) * poo_ref[1:Ho + 1, 0:Wo, :] + wt(7) * poe_ref[1:Ho + 1, 0:Wo, :]
           + wt(8) * poo_ref[1:Ho + 1, 1:Wo + 1, :])
    acc = jnp.maximum(acc * sd_ref[...] + bd_ref[...], 0.0)
    accb = acc.astype(jnp.bfloat16)
    for r in range(Ho):
        g2_ref[r * Wo:(r + 1) * Wo, :] = accb[r]
    y = jnp.dot(g2_ref[...], w2_ref[...], preferred_element_type=jnp.float32)
    y = y * s2_ref[...] + b2_ref[...]
    o_ref[0] = y.astype(o_ref.dtype)


# ---------------------------------------------------------------------------
# Kernel 4: fused decoder ResidualBlock:
#   (optional skip-add) -> dw3x3 -> pw -> dw3x3 -> pw  +  conv1x1 skip  -> ReLU
# ---------------------------------------------------------------------------
def _rb_kernel(*refs, H, W, has_add):
    if has_add:
        (x_ref, x2_ref, wd1, sd1, bd1, wp1, sp1, bp1,
         wd2, sd2, bd2, wp2, sp2, bp2, wsk, ssk, bsk,
         o_ref, hp1_ref, a2_ref, hp2_ref, b2_ref) = refs
        xv = x_ref[0].astype(jnp.float32) + x2_ref[0].astype(jnp.float32)
    else:
        (x_ref, wd1, sd1, bd1, wp1, sp1, bp1,
         wd2, sd2, bd2, wp2, sp2, bp2, wsk, ssk, bsk,
         o_ref, hp1_ref, a2_ref, hp2_ref, b2_ref) = refs
        xv = x_ref[0].astype(jnp.float32)

    xb = xv.astype(jnp.bfloat16)                                    # for skip matmul
    # --- dw1 on x ---
    hp1_ref[...] = jnp.zeros(hp1_ref.shape, jnp.float32)
    for r in range(H):
        hp1_ref[1 + r, 1:W + 1, :] = xv[r * W:(r + 1) * W, :]
    w1 = wd1[...]
    acc1 = hp1_ref[0:H, 0:W, :] * w1[0:1, :]
    for k in range(1, 9):
        ky, kx = divmod(k, 3)
        acc1 = acc1 + hp1_ref[ky:ky + H, kx:kx + W, :] * w1[k:k + 1, :]
    acc1 = jnp.maximum(acc1 * sd1[...] + bd1[...], 0.0).astype(jnp.bfloat16)
    for r in range(H):
        a2_ref[r * W:(r + 1) * W, :] = acc1[r]
    # --- pw1 ---
    h1 = jnp.dot(a2_ref[...], wp1[...], preferred_element_type=jnp.float32)
    h1 = jnp.maximum(h1 * sp1[...] + bp1[...], 0.0)                 # (H*W, Cout)
    # --- dw2 ---
    hp2_ref[...] = jnp.zeros(hp2_ref.shape, jnp.float32)
    for r in range(H):
        hp2_ref[1 + r, 1:W + 1, :] = h1[r * W:(r + 1) * W, :]
    w2 = wd2[...]
    acc2 = hp2_ref[0:H, 0:W, :] * w2[0:1, :]
    for k in range(1, 9):
        ky, kx = divmod(k, 3)
        acc2 = acc2 + hp2_ref[ky:ky + H, kx:kx + W, :] * w2[k:k + 1, :]
    acc2 = jnp.maximum(acc2 * sd2[...] + bd2[...], 0.0).astype(jnp.bfloat16)
    for r in range(H):
        b2_ref[r * W:(r + 1) * W, :] = acc2[r]
    # --- pw2 (no relu) ---
    y = jnp.dot(b2_ref[...], wp2[...], preferred_element_type=jnp.float32)
    y = y * sp2[...] + bp2[...]
    # --- 1x1 conv skip (no relu) ---
    sk = jnp.dot(xb, wsk[...], preferred_element_type=jnp.float32)
    sk = sk * ssk[...] + bsk[...]
    o_ref[0] = jnp.maximum(y + sk, 0.0).astype(o_ref.dtype)


# ---------------------------------------------------------------------------
# Wrappers (XLA glue: reshapes / pads / parity splits / phase interleave)
# ---------------------------------------------------------------------------
@functools.partial(jax.jit, static_argnames=("use_res",))
def fused_ir_s1_chain(x, p, *, use_res):
    """p holds weights stacked over the chain: w1 (B,Cin,Chid), s1 (B,1,Chid), ..."""
    N, H, W, Cin = x.shape
    nblk = p['w1'].shape[0]
    Chid = p['w1'].shape[2]
    Cout = p['w2'].shape[2]
    wkeys = ('w1', 's1', 'b1', 'wd', 'sd', 'bd', 'w2', 's2', 'b2')
    w_in = [p[k] for k in wkeys]
    w_specs = [pl.BlockSpec(p[k].shape, lambda b: (0, 0, 0)) for k in wkeys]
    x2 = x.reshape(N, H * W, Cin)
    out = pl.pallas_call(
        functools.partial(_ir_s1_chain_kernel, H=H, W=W, nblk=nblk, use_res=use_res),
        out_shape=jax.ShapeDtypeStruct((N, H * W, Cout), jnp.bfloat16),
        grid=(N,),
        in_specs=[pl.BlockSpec((1, H * W, Cin), lambda b: (b, 0, 0))] + w_specs,
        out_specs=pl.BlockSpec((1, H * W, Cout), lambda b: (b, 0, 0)),
        scratch_shapes=[pltpu.VMEM((H + 2, W + 2, Chid), jnp.float32),
                        pltpu.VMEM((H * W, Chid), jnp.bfloat16)],
        compiler_params=pltpu.CompilerParams(dimension_semantics=("parallel",)),
    )(x2, *w_in)
    return out.reshape(N, H, W, Cout)


@jax.jit
def fused_ir_s2(x, p):
    N, H, W, Cin = x.shape
    Chid = p['w1'].shape[1]
    Cout = p['w2'].shape[1]
    wkeys = ('w1', 's1', 'b1', 'wd', 'sd', 'bd', 'w2', 's2', 'b2')
    w_in = [p[k] for k in wkeys]
    w_specs = [pl.BlockSpec(p[k].shape, lambda b: (0, 0)) for k in wkeys]
    Ho, Wo = H // 2, W // 2
    phases = [x[:, py::2, px::2, :].reshape(N, Ho * Wo, Cin)
              for py in (0, 1) for px in (0, 1)]                    # ee, eo, oe, oo
    out = pl.pallas_call(
        functools.partial(_ir_s2_kernel, Ho=Ho, Wo=Wo),
        out_shape=jax.ShapeDtypeStruct((N, Ho * Wo, Cout), jnp.bfloat16),
        grid=(N,),
        in_specs=[pl.BlockSpec((1, Ho * Wo, Cin), lambda b: (b, 0, 0))] * 4 + w_specs,
        out_specs=pl.BlockSpec((1, Ho * Wo, Cout), lambda b: (b, 0, 0)),
        scratch_shapes=[pltpu.VMEM((Ho, Wo, Chid), jnp.float32),
                        pltpu.VMEM((Ho, Wo + 1, Chid), jnp.float32),
                        pltpu.VMEM((Ho + 1, Wo, Chid), jnp.float32),
                        pltpu.VMEM((Ho + 1, Wo + 1, Chid), jnp.float32),
                        pltpu.VMEM((Ho * Wo, Chid), jnp.bfloat16)],
        compiler_params=pltpu.CompilerParams(dimension_semantics=("parallel",)),
    )(*phases, *w_in)
    return out.reshape(N, Ho, Wo, Cout)


@functools.partial(jax.jit, static_argnames=("has_add",))
def fused_residual_block(x, x2, p, *, has_add):
    N, H, W, Cin = x.shape
    Cout = p['wp1'].shape[1]
    inputs = [x.reshape(N, H * W, Cin)]
    in_specs = [pl.BlockSpec((1, H * W, Cin), lambda b: (b, 0, 0))]
    if has_add:
        inputs.append(x2.reshape(N, H * W, Cin))
        in_specs.append(pl.BlockSpec((1, H * W, Cin), lambda b: (b, 0, 0)))
    wkeys = ('wd1', 'sd1', 'bd1', 'wp1', 'sp1', 'bp1',
             'wd2', 'sd2', 'bd2', 'wp2', 'sp2', 'bp2', 'wsk', 'ssk', 'bsk')
    inputs += [p[k] for k in wkeys]
    in_specs += [pl.BlockSpec(p[k].shape, lambda b: (0, 0)) for k in wkeys]
    out = pl.pallas_call(
        functools.partial(_rb_kernel, H=H, W=W, has_add=has_add),
        out_shape=jax.ShapeDtypeStruct((N, H * W, Cout), jnp.bfloat16),
        grid=(N,),
        in_specs=in_specs,
        out_specs=pl.BlockSpec((1, H * W, Cout), lambda b: (b, 0, 0)),
        scratch_shapes=[pltpu.VMEM((H + 2, W + 2, Cin), jnp.float32),
                        pltpu.VMEM((H * W, Cin), jnp.bfloat16),
                        pltpu.VMEM((H + 2, W + 2, Cout), jnp.float32),
                        pltpu.VMEM((H * W, Cout), jnp.bfloat16)],
        compiler_params=pltpu.CompilerParams(dimension_semantics=("parallel",)),
    )(*inputs)
    return out.reshape(N, H, W, Cout)


@jax.jit
def deconv4x4_s2(x, w4):
    """ConvTranspose2d(k=4, s=2, p=1) via sub-pixel decomposition (4 phases of 2x2 convs)."""
    N, H, W, C = x.shape
    xp = jnp.pad(x, ((0, 0), (1, 1), (1, 1), (0, 0)))
    phases = []
    for py in (0, 1):
        for px in (0, 1):
            taps = [xp[:, py + ta:py + ta + H, px + tb:px + tb + W, :]
                    for ta in (0, 1) for tb in (0, 1)]
            phases.append(jnp.concatenate(taps, axis=-1).reshape(N * H * W, 4 * C))
    pstack = jnp.stack(phases, axis=0)                              # (4, N*H*W, 4C)
    ones = jnp.ones((4, 1, C), jnp.float32)
    zeros = jnp.zeros((4, 1, C), jnp.float32)
    o = fused_matmul(pstack, w4, ones, zeros, relu=False, out_dtype=jnp.bfloat16)
    o = o.reshape(2, 2, N, H, W, C)
    return jnp.transpose(o, (2, 3, 0, 4, 1, 5)).reshape(N, 2 * H, 2 * W, C)


@jax.jit
def stem_conv(x, w, s, b):
    """3x3 stride-2 pad-1 conv + BN + ReLU (tiny Cin=3 -> im2col in XLA)."""
    N, H, W, C = x.shape
    Ho, Wo = (H + 1) // 2, (W + 1) // 2
    xp = jnp.pad(x, ((0, 0), (1, 1), (1, 1), (0, 0)))
    cols = [xp[:, kh:kh + 2 * (Ho - 1) + 1:2, kw:kw + 2 * (Wo - 1) + 1:2, :]
            for kh in range(3) for kw in range(3)]
    patches = jnp.concatenate(cols, axis=-1).reshape(1, N * Ho * Wo, 9 * C)
    out = fused_matmul(patches, w, s, b, relu=True, out_dtype=jnp.bfloat16)
    return out.reshape(N, Ho, Wo, w.shape[2])


@jax.jit
def head_conv(x, w):
    """pred+edge combined 3x3 stride-1 pad-1 conv (no BN / bias / relu)."""
    N, H, W, C = x.shape
    xp = jnp.pad(x, ((0, 0), (1, 1), (1, 1), (0, 0)))
    cols = [xp[:, kh:kh + H, kw:kw + W, :] for kh in range(3) for kw in range(3)]
    patches = jnp.concatenate(cols, axis=-1).reshape(1, N * H * W, 9 * C)
    ones = jnp.ones((1, 1, w.shape[2]), jnp.float32)
    zeros = jnp.zeros((1, 1, w.shape[2]), jnp.float32)
    out = fused_matmul(patches, w, ones, zeros, relu=False, out_dtype=jnp.float32)
    return out.reshape(N, H, W, w.shape[2])


# ---------------------------------------------------------------------------
# Parameters (deterministic, synthetic)
# ---------------------------------------------------------------------------
def depth(c, ratio=1.0, minc=16):
    return int(np.clip(c, minc, int(c * ratio)))


STAGE_CFG = {
    'stage1': [[32, 16, 1, 1]],
    'stage2': [[16, 24, 2, 6], [24, 24, 1, 6]],
    'stage3': [[24, 32, 2, 6], [32, 32, 1, 6], [32, 32, 1, 6]],
    'stage4': [[32, 64, 2, 6], [64, 64, 1, 6], [64, 64, 1, 6], [64, 64, 1, 6]],
    'stage5': [[64, 96, 1, 6], [96, 96, 1, 6], [96, 96, 1, 6]],
    'stage6': [[96, 160, 2, 6], [160, 160, 1, 6], [160, 160, 1, 6]],
    'stage7': [[160, 320, 1, 6]],
}


def _split_stage(blocks):
    """Group a stage into segments: ('s2', [blk]) or ('s1c', [identical s1 blocks...])."""
    segs, i = [], 0
    while i < len(blocks):
        if blocks[i][2] == 2:
            segs.append(('s2', [tuple(blocks[i])]))
            i += 1
        else:
            j = i
            while (j < len(blocks) and blocks[j][2] == 1
                   and blocks[j][0] == blocks[i][0] and blocks[j][1] == blocks[i][1]
                   and blocks[j][3] == blocks[i][3]):
                j += 1
            segs.append(('s1c', [tuple(b) for b in blocks[i:j]]))
            i = j
    return segs


def init_params(key):
    keys = iter(jax.random.split(key, 1024))

    def nk():
        return next(keys)

    def bn(c):
        gamma = 1.0 + 0.05 * jax.random.normal(nk(), (c,), jnp.float32)
        beta = 0.05 * jax.random.normal(nk(), (c,), jnp.float32)
        scale = gamma / jnp.sqrt(1.0 + 1e-5)  # eval BN: running_mean=0, running_var=1
        return scale.reshape(1, c), beta.reshape(1, c)

    def pw(cin, cout):
        w = (jax.random.normal(nk(), (cin, cout), jnp.float32)
             * np.sqrt(2.0 / cin)).astype(jnp.bfloat16)
        s, b = bn(cout)
        return w, s, b

    def dwp(c):
        w = jax.random.normal(nk(), (9, c), jnp.float32) * np.sqrt(2.0 / 9.0)
        s, b = bn(c)
        return w, s, b

    def ir(inp, oup, t):
        hid = inp * t
        p = {}
        p['w1'], p['s1'], p['b1'] = pw(inp, hid)
        p['wd'], p['sd'], p['bd'] = dwp(hid)
        p['w2'], p['s2'], p['b2'] = pw(hid, oup)
        return p

    def stack_ir(plist):
        return {k: jnp.stack([p[k] for p in plist], axis=0) for k in plist[0]}

    def rb(inp, oup):
        p = {}
        p['wd1'], p['sd1'], p['bd1'] = dwp(inp)
        p['wp1'], p['sp1'], p['bp1'] = pw(inp, oup)
        p['wd2'], p['sd2'], p['bd2'] = dwp(oup)
        p['wp2'], p['sp2'], p['bp2'] = pw(oup, oup)
        p['wsk'], p['ssk'], p['bsk'] = pw(inp, oup)
        return p

    def full_conv(cin, cout, k, with_bn):
        wt = jax.random.normal(nk(), (cout, cin, k, k), jnp.float32) * np.sqrt(
            2.0 / (cin * k * k))
        wm = jnp.transpose(wt, (2, 3, 1, 0)).reshape(1, k * k * cin, cout)
        wm = wm.astype(jnp.bfloat16)
        if with_bn:
            s, b = bn(cout)
            s, b = s.reshape(1, 1, cout), b.reshape(1, 1, cout)
        else:
            s = jnp.ones((1, 1, cout), jnp.float32)
            b = jnp.zeros((1, 1, cout), jnp.float32)
        return {'w': wm, 's': s, 'b': b}

    def deconv_w(c):
        # torch ConvTranspose2d weight (Cin, Cout, 4, 4) -> four 2x2 sub-pixel phase mats.
        wt = jax.random.normal(nk(), (c, c, 4, 4), jnp.float32) * np.sqrt(2.0 / (c * 16))
        ktab = [[3, 1], [2, 0]]                 # kernel index per (phase parity, tap offset)
        mats = []
        for py in (0, 1):
            for px in (0, 1):
                blocks = [wt[:, :, ktab[py][ta], ktab[px][tb]]
                          for ta in (0, 1) for tb in (0, 1)]
                mats.append(jnp.concatenate(blocks, axis=0))        # (4C, C)
        return jnp.stack(mats, axis=0).astype(jnp.bfloat16)         # (4, 4C, C)

    P = {}
    P['stem'] = full_conv(3, depth(32), 3, with_bn=True)
    for name, blocks in STAGE_CFG.items():
        segs = []
        for kind, blks in _split_stage(blocks):
            inp, oup, _, t = blks[0]
            if kind == 's2':
                segs.append(('s2', False, ir(inp, oup, t)))
            else:
                use_res = (inp == oup)
                segs.append(('s1c', use_res, stack_ir([ir(inp, oup, t) for _ in blks])))
        P[name] = segs
    P['transit1'] = rb(depth(320), depth(96))
    P['transit2'] = rb(depth(96), depth(32))
    P['transit3'] = rb(depth(32), depth(24))
    P['transit4'] = rb(depth(24), depth(16))
    P['transit5'] = rb(depth(16), depth(8))
    P['deconv1'] = deconv_w(depth(96))
    P['deconv2'] = deconv_w(depth(32))
    P['deconv3'] = deconv_w(depth(24))
    P['deconv4'] = deconv_w(depth(16))
    P['deconv5'] = deconv_w(depth(8))
    pred = full_conv(depth(8), 2, 3, with_bn=False)
    edge = full_conv(depth(8), 2, 3, with_bn=False)
    P['head_w'] = jnp.concatenate([pred['w'], edge['w']], axis=2)   # (1, 72, 4)
    return P


# ---------------------------------------------------------------------------
# Full forward pass (mirrors PotraitNet.forward)
# ---------------------------------------------------------------------------
def forward(P, x_nchw):
    x = jnp.transpose(x_nchw, (0, 2, 3, 1)).astype(jnp.bfloat16)    # NCHW -> NHWC bf16
    h = stem_conv(x, P['stem']['w'], P['stem']['s'], P['stem']['b'])

    def run_stage(h, name):
        for kind, use_res, p in P[name]:
            if kind == 's2':
                h = fused_ir_s2(h, p)
            else:
                h = fused_ir_s1_chain(h, p, use_res=use_res)
        return h

    h = run_stage(h, 'stage1')
    feature_1_4 = run_stage(h, 'stage2')
    feature_1_8 = run_stage(feature_1_4, 'stage3')
    feature_1_16 = run_stage(run_stage(feature_1_8, 'stage4'), 'stage5')
    feature_1_32 = run_stage(run_stage(feature_1_16, 'stage6'), 'stage7')

    up_1_16 = deconv4x4_s2(
        fused_residual_block(feature_1_32, None, P['transit1'], has_add=False),
        P['deconv1'])
    up_1_8 = deconv4x4_s2(
        fused_residual_block(feature_1_16, up_1_16, P['transit2'], has_add=True),
        P['deconv2'])
    up_1_4 = deconv4x4_s2(
        fused_residual_block(feature_1_8, up_1_8, P['transit3'], has_add=True),
        P['deconv3'])
    up_1_2 = deconv4x4_s2(
        fused_residual_block(feature_1_4, up_1_4, P['transit4'], has_add=True),
        P['deconv4'])
    up_1_1 = deconv4x4_s2(
        fused_residual_block(up_1_2, None, P['transit5'], has_add=False),
        P['deconv5'])

    heads = head_conv(up_1_1, P['head_w'])                          # (N, H, W, 4) f32
    pred = jnp.transpose(heads[..., 0:2], (0, 3, 1, 2))             # back to NCHW
    edge = jnp.transpose(heads[..., 2:4], (0, 3, 1, 2))
    return pred, edge


if __name__ == "__main__":
    key = jax.random.PRNGKey(0)
    pkey, xkey = jax.random.split(key)
    P = init_params(pkey)
    # 5 stride-2 stages -> input spatial must be divisible by 32; 64 is the smallest.
    x = jax.random.normal(xkey, (2, 3, 64, 64), jnp.float32)
    pred, edge = forward(P, x)
    jax.block_until_ready((pred, edge))
    assert pred.shape == (2, 2, 64, 64), pred.shape
    assert edge.shape == (2, 2, 64, 64), edge.shape
    assert bool(jnp.all(jnp.isfinite(pred))) and bool(jnp.all(jnp.isfinite(edge)))
    print("KERNEL_OK")
</pallas_src>

<mosaic_0001>
module attributes {stable_mosaic.version = 11 : i64} {
  func.func @_mm_kernel(%arg0: i32, %arg1: i32, %arg2: memref<1x512x27xbf16, #tpu.memory_space<vmem>>, %arg3: memref<1x27x32xbf16, #tpu.memory_space<vmem>>, %arg4: memref<1x1x32xf32, #tpu.memory_space<vmem>>, %arg5: memref<1x1x32xf32, #tpu.memory_space<vmem>>, %arg6: memref<1x512x32xbf16, #tpu.memory_space<vmem>>) attributes {dimension_semantics = [#tpu.dimension_semantics<parallel>, #tpu.dimension_semantics<parallel>], iteration_bounds = array<i64: 1, 4>, scalar_prefetch = 0 : i64, scratch_operands = 0 : i64, tpu.core_type = #tpu.core_type<tc>, window_params = [{transform_indices = @transform_0, window_bounds = array<i64: 1, 512, 27>}, {transform_indices = @transform_1, window_bounds = array<i64: 1, 27, 32>}, {transform_indices = @transform_2, window_bounds = array<i64: 1, 1, 32>}, {transform_indices = @transform_3, window_bounds = array<i64: 1, 1, 32>}, {transform_indices = @transform_4, window_bounds = array<i64: 1, 512, 32>}]} {
    %c0 = arith.constant 0 : index
    %c0_0 = arith.constant 0 : index
    %c0_1 = arith.constant 0 : index
    %0 = vector.load %arg2[%c0, %c0_0, %c0_1] : memref<1x512x27xbf16, #tpu.memory_space<vmem>>, vector<1x512x27xbf16>
    %1 = vector.shape_cast %0 : vector<1x512x27xbf16> to vector<512x27xbf16>
    %c0_2 = arith.constant 0 : index
    %c0_3 = arith.constant 0 : index
    %c0_4 = arith.constant 0 : index
    %2 = vector.load %arg3[%c0_2, %c0_3, %c0_4] : memref<1x27x32xbf16, #tpu.memory_space<vmem>>, vector<1x27x32xbf16>
    %3 = vector.shape_cast %2 : vector<1x27x32xbf16> to vector<27x32xbf16>
    %cst = arith.constant dense<0.000000e+00> : vector<512x32xf32>
    %4 = tpu.matmul %1, %3, %cst {dimension_numbers = #tpu.dot_dimension_numbers<[1], [0], [0], [1], [0, 0, 1, 1], [], []>} : vector<512x27xbf16>, vector<27x32xbf16>, vector<512x32xf32> -> vector<512x32xf32>
    %c0_5 = arith.constant 0 : index
    %c0_6 = arith.constant 0 : index
    %c0_7 = arith.constant 0 : index
    %5 = vector.load %arg4[%c0_5, %c0_6, %c0_7] : memref<1x1x32xf32, #tpu.memory_space<vmem>>, vector<1x1x32xf32>
    %6 = vector.shape_cast %5 : vector<1x1x32xf32> to vector<1x32xf32>
    %7 = vector.broadcast %6 : vector<1x32xf32> to vector<512x32xf32>
    %8 = arith.mulf %4, %7 : vector<512x32xf32>
    %c0_8 = arith.constant 0 : index
    %c0_9 = arith.constant 0 : index
    %c0_10 = arith.constant 0 : index
    %9 = vector.load %arg5[%c0_8, %c0_9, %c0_10] : memref<1x1x32xf32, #tpu.memory_space<vmem>>, vector<1x1x32xf32>
    %10 = vector.shape_cast %9 : vector<1x1x32xf32> to vector<1x32xf32>
    %11 = vector.broadcast %10 : vector<1x32xf32> to vector<512x32xf32>
    %12 = arith.addf %8, %11 : vector<512x32xf32>
    %cst_11 = arith.constant 0.000000e+00 : f32
    %13 = vector.broadcast %cst_11 : f32 to vector<512x32xf32>
    %14 = arith.maximumf %12, %13 : vector<512x32xf32>
    %15 = arith.truncf %14 : vector<512x32xf32> to vector<512x32xbf16>
    %c0_12 = arith.constant 0 : index
    %c0_13 = arith.constant 0 : index
    %c0_14 = arith.constant 0 : index
    %16 = vector.load %arg6[%c0_12, %c0_13, %c0_14] : memref<1x512x32xbf16, #tpu.memory_space<vmem>>, vector<1x512x32xbf16>
    %17 = vector.shape_cast %16 : vector<1x512x32xbf16> to vector<512x32xbf16>
    %18 = vector.shape_cast %15 : vector<512x32xbf16> to vector<1x512x32xbf16>
    tpu.vector_store %arg6[%c0_12, %c0_13, %c0_14], %18 {strides = array<i32>} : memref<1x512x32xbf16, #tpu.memory_space<vmem>>, vector<1x512x32xbf16>,
    return
  }
  func.func @transform_0(%arg0: i32, %arg1: i32) -> (i32, i32, i32) {
    %c0_i32 = arith.constant 0 : i32
    %c0_i32_0 = arith.constant 0 : i32
    return %arg0, %arg1, %c0_i32 : i32, i32, i32
  }
  func.func @transform_1(%arg0: i32, %arg1: i32) -> (i32, i32, i32) {
    %c0_i32 = arith.constant 0 : i32
    %c0_i32_0 = arith.constant 0 : i32
    %c0_i32_1 = arith.constant 0 : i32
    return %arg0, %c0_i32, %c0_i32_0 : i32, i32, i32
  }
  func.func @transform_2(%arg0: i32, %arg1: i32) -> (i32, i32, i32) {
    %c0_i32 = arith.constant 0 : i32
    %c0_i32_0 = arith.constant 0 : i32
    %c0_i32_1 = arith.constant 0 : i32
    return %arg0, %c0_i32, %c0_i32_0 : i32, i32, i32
  }
  func.func @transform_3(%arg0: i32, %arg1: i32) -> (i32, i32, i32) {
    %c0_i32 = arith.constant 0 : i32
    %c0_i32_0 = arith.constant 0 : i32
    %c0_i32_1 = arith.constant 0 : i32
    return %arg0, %c0_i32, %c0_i32_0 : i32, i32, i32
  }
  func.func @transform_4(%arg0: i32, %arg1: i32) -> (i32, i32, i32) {
    %c0_i32 = arith.constant 0 : i32
    %c0_i32_0 = arith.constant 0 : i32
    return %arg0, %arg1, %c0_i32 : i32, i32, i32
  }
}

</mosaic_0001>

<llo_original>
// kernel: fused_matmul.1
$region0: #{fused_matmul.1}
  #allocation0 [shape = 'u32[]', space=smem, size = 0x4, offset = 0x4, fixed_abs, tag = 'smem constant byte address 0x4 - core index']
  #allocation1 [shape = 'u32[144,128]{1,0:T(1,128)}', space=vmem, size = 0x12000, scoped, tag = 'internal scratch']
  %s0 = inlined_call_operand.vmem [shape: bf16[1,2048,27], index: 0, kind: input, shape index: {}]
  %s1 = inlined_call_operand.vmem [shape: bf16[1,27,32], index: 1, kind: input, shape index: {}]
  %s2 = inlined_call_operand.vmem [shape: f32[1,1,32], index: 2, kind: input, shape index: {}]
  %s3 = inlined_call_operand.vmem [shape: f32[1,1,32], index: 3, kind: input, shape index: {}]
  %s4 = inlined_call_operand.vmem [shape: bf16[1,2048,32], index: 4, kind: output, shape index: {}]
  %s5 = sld [smem:[#allocation0]]
  $region49: #{fused_matmul.1} parent=0
    _
  %s7 = ssub.s32 1, %s5
  %s8 = scalar_select 0, %s7, %s5
  loop: start=0, step=1, limit=6
  $region2: #{fused_matmul.1} parent=0 // loop_pre_header
    _
  $region3: #{fused_matmul.1} parent=0 // loop_header
    %s10 = sphi 0, %s14
    %p11 = scmp.ge.s32.totalorder %s10, 6
    %s17 = sphi 0, %s29
    %s18 = sphi 0, %s25
    %s19 = sphi 0, %s17
    %s20 = sphi 0, %s18
    %s21 = sphi 0, %s19
    %s22 = sphi 0, %s20
    %s34 = sphi 0, %s36
    %s37 = sphi 0, %s34
    %s38 = sphi 0, %s37
    %s54 = sphi 0, %s38
    %s60 = sphi 0, %s62
    %s63 = sphi 0, %s60
    %s64 = sphi 0, %s63
    %s80 = sphi 0, %s64
    %s86 = sphi 0, %s88
    %s89 = sphi 0, %s86
    %s90 = sphi 0, %s89
    %s106 = sphi 0, %s90
    %s112 = sphi 0, %s114
    %s115 = sphi 0, %s112
    %s116 = sphi 0, %s115
    %s132 = sphi 0, %s116
    %s140 = sphi 0, %s142
    %s143 = sphi 0, %s140
    %s144 = sphi 0, %s143
    %s160 = sphi 0, %s144
  $region4: #{fused_matmul.1} parent=0 // loop_header_branch
    %13 = sbr.rel (%p11) target = $region8
  $region5: #{fused_matmul.1} parent=0 // loop_body
    %s15 = ssub.s32 %s10, 1
    %s16 = ssub.s32 %s10, 2
    %s23 = sadd.s32 1, %s18
    %p24 = scmp.ge.s32.totalorder %s23, 4
    %s25 = scalar_select %p24, 0, %s23
    %s26 = sadd.s32 1, %s17
    %s27 = scalar_select %p24, %s26, %s17
    %p28 = scmp.ge.s32.totalorder %s27, 1
    %s29 = scalar_select %p28, 0, %s27
    %s30 = ssub.s32 %s17, %s29
    %s31 = ssub.s32 %s18, %s25
    %s32 = sor.u32 %s30, %s31
    %p33 = scmp.eq.s32.totalorder %s32, 0
    %s35 = sadd.s32 %s34, 1
    %s36 = scalar_select %p33, %s34, %s35
    %p39 = pneg %p33
    %p40 = scmp.eq.s32.totalorder %s10, 3
    %p41 = por %p39, %p40
    %p42 = scmp.ne.s32.totalorder %s34, %s37
    %p43 = scmp.eq.s32.totalorder %s10, 0
    %p44 = por %p42, %p43
    %p45 = scmp.ne.s32.totalorder %s34, %s37
    %p46 = scmp.eq.s32.totalorder %s15, 3
    %p47 = por %p45, %p46
    %p48 = scmp.ne.s32.totalorder %s37, %s38
    %p49 = scmp.eq.s32.totalorder %s15, 0
    %p50 = por %p48, %p49
    %p51 = scmp.ne.s32.totalorder %s37, %s38
    %p52 = scmp.eq.s32.totalorder %s16, 3
    %p53 = por %p51, %p52
    %p55 = scmp.ne.s32.totalorder %s38, %s54
    %p56 = scmp.eq.s32.totalorder %s16, 0
    %p57 = por %p55, %p56
    %s58 = ssub.s32 %s17, %s29
    %p59 = scmp.eq.s32.totalorder %s58, 0
    %s61 = sadd.s32 %s60, 1
    %s62 = scalar_select %p59, %s60, %s61
    %p65 = pneg %p59
    %p66 = scmp.eq.s32.totalorder %s10, 3
    %p67 = por %p65, %p66
    %p68 = scmp.ne.s32.totalorder %s60, %s63
    %p69 = scmp.eq.s32.totalorder %s10, 0
    %p70 = por %p68, %p69
    %p71 = scmp.ne.s32.totalorder %s60, %s63
    %p72 = scmp.eq.s32.totalorder %s15, 3
    %p73 = por %p71, %p72
    %p74 = scmp.ne.s32.totalorder %s63, %s64
    %p75 = scmp.eq.s32.totalorder %s15, 0
    %p76 = por %p74, %p75
    %p77 = scmp.ne.s32.totalorder %s63, %s64
    %p78 = scmp.eq.s32.totalorder %s16, 3
    %p79 = por %p77, %p78
    %p81 = scmp.ne.s32.totalorder %s64, %s80
    %p82 = scmp.eq.s32.totalorder %s16, 0
    %p83 = por %p81, %p82
    %s84 = ssub.s32 %s17, %s29
    %p85 = scmp.eq.s32.totalorder %s84, 0
    %s87 = sadd.s32 %s86, 1
    %s88 = scalar_select %p85, %s86, %s87
    %p91 = pneg %p85
    %p92 = scmp.eq.s32.totalorder %s10, 3
    %p93 = por %p91, %p92
    %p94 = scmp.ne.s32.totalorder %s86, %s89
    %p95 = scmp.eq.s32.totalorder %s10, 0
    %p96 = por %p94, %p95
    %p97 = scmp.ne.s32.totalorder %s86, %s89
    %p98 = scmp.eq.s32.totalorder %s15, 3
    %p99 = por %p97, %p98
    %p100 = scmp.ne.s32.totalorder %s89, %s90
    %p101 = scmp.eq.s32.totalorder %s15, 0
    %p102 = por %p100, %p101
    %p103 = scmp.ne.s32.totalorder %s89, %s90
    %p104 = scmp.eq.s32.totalorder %s16, 3
    %p105 = por %p103, %p104
    %p107 = scmp.ne.s32.totalorder %s90, %s106
    %p108 = scmp.eq.s32.totalorder %s16, 0
    %p109 = por %p107, %p108
    %s110 = ssub.s32 %s17, %s29
    %p111 = scmp.eq.s32.totalorder %s110, 0
    %s113 = sadd.s32 %s112, 1
    %s114 = scalar_select %p111, %s112, %s113
    %p117 = pneg %p111
    %p118 = scmp.eq.s32.totalorder %s10, 3
    %p119 = por %p117, %p118
    %p120 = scmp.ne.s32.totalorder %s112, %s115
    %p121 = scmp.eq.s32.totalorder %s10, 0
    %p122 = por %p120, %p121
    %p123 = scmp.ne.s32.totalorder %s112, %s115
    %p124 = scmp.eq.s32.totalorder %s15, 3
    %p125 = por %p123, %p124
    %p126 = scmp.ne.s32.totalorder %s115, %s116
    %p127 = scmp.eq.s32.totalorder %s15, 0
    %p128 = por %p126, %p127
    %p129 = scmp.ne.s32.totalorder %s115, %s116
    %p130 = scmp.eq.s32.totalorder %s16, 3
    %p131 = por %p129, %p130
    %p133 = scmp.ne.s32.totalorder %s116, %s132
    %p134 = scmp.eq.s32.totalorder %s16, 0
    %p135 = por %p133, %p134
    %s136 = ssub.s32 %s17, %s29
    %s137 = ssub.s32 %s18, %s25
    %s138 = sor.u32 %s136, %s137
    %p139 = scmp.eq.s32.totalorder %s138, 0
    %s141 = sadd.s32 %s140, 1
    %s142 = scalar_select %p139, %s140, %s141
    %p145 = pneg %p139
    %p146 = scmp.eq.s32.totalorder %s10, 3
    %p147 = por %p145, %p146
    %p148 = scmp.ne.s32.totalorder %s140, %s143
    %p149 = scmp.eq.s32.totalorder %s10, 0
    %p150 = por %p148, %p149
    %p151 = scmp.ne.s32.totalorder %s140, %s143
    %p152 = scmp.eq.s32.totalorder %s15, 3
    %p153 = por %p151, %p152
    %p154 = scmp.ne.s32.totalorder %s143, %s144
    %p155 = scmp.eq.s32.totalorder %s15, 0
    %p156 = por %p154, %p155
    %p157 = scmp.ne.s32.totalorder %s143, %s144
    %p158 = scmp.eq.s32.totalorder %s16, 3
    %p159 = por %p157, %p158
    %p161 = scmp.ne.s32.totalorder %s144, %s160
    %p162 = scmp.eq.s32.totalorder %s16, 0
    %p163 = por %p161, %p162
    %p164 = scmp.le.s32.totalorder 1, %s10
    %p165 = scmp.lt.s32.totalorder %s10, 5
    %p166 = pnand %p164, %p165
    %p167 = pneg %p166
    // Predicated region
    $region9: #{fused_matmul.1} parent=5 // pred_check
      _
    $region10: #{fused_matmul.1} parent=5 // pred_check_branch
      %169 = sbr.rel (%p166) target = $region12
    $region11: #{fused_matmul.1} parent=5 // pred_region
      %s170 = ssub.s32 %s10, 1
      // Predicated region
      $region13: #{fused_matmul.1} parent=11 // pred_check
        %p171 = pneg %p76
      $region14: #{fused_matmul.1} parent=11 // pred_check_branch
        %173 = sbr.rel (%p171) target = $region16
      $region15: #{fused_matmul.1} parent=11 // pred_region
        %p174 = scmp.lt.s32.totalorder %s19, 0
        %s175 = scalar_select %p174, %s19, 0
        %s176 = smul.addr %s175, 4
        %s177 = smul.addr %s176, 4
        %s178 = scalar_lea.vmem %s1, %s177
      $region16: #{fused_matmul.1} parent=11 // pred_fallthru
        _
      // Predicated region
      $region17: #{fused_matmul.1} parent=11 // pred_check
        %p179 = pneg %p102
      $region18: #{fused_matmul.1} parent=11 // pred_check_branch
        %181 = sbr.rel (%p179) target = $region20
      $region19: #{fused_matmul.1} parent=11 // pred_region
        %p182 = scmp.lt.s32.totalorder %s19, 0
        %s183 = scalar_select %p182, %s19, 0
        %s184 = scalar_lea.vmem %s2, %s183
      $region20: #{fused_matmul.1} parent=11 // pred_fallthru
        _
      // Predicated region
      $region21: #{fused_matmul.1} parent=11 // pred_check
        %p185 = pneg %p128
      $region22: #{fused_matmul.1} parent=11 // pred_check_branch
        %187 = sbr.rel (%p185) target = $region24
      $region23: #{fused_matmul.1} parent=11 // pred_region
        %p188 = scmp.lt.s32.totalorder %s19, 0
        %s189 = scalar_select %p188, %s19, 0
        %s190 = scalar_lea.vmem %s3, %s189
      $region24: #{fused_matmul.1} parent=11 // pred_fallthru
        _
    $region12: #{fused_matmul.1} parent=5 // pred_fallthru
      _
    %p191 = scmp.lt.s32.totalorder %s10, 4
    // Predicated region
    $region25: #{fused_matmul.1} parent=5 // pred_check
      %p192 = pneg %p191
    $region26: #{fused_matmul.1} parent=5 // pred_check_branch
      %194 = sbr.rel (%p192) target = $region28
    $region27: #{fused_matmul.1} parent=5 // pred_region
      // Predicated region
      $region29: #{fused_matmul.1} parent=27 // pred_check
        %p195 = pneg %p44
      $region30: #{fused_matmul.1} parent=27 // pred_check_branch
        %197 = sbr.rel (%p195) target = $region32
      $region31: #{fused_matmul.1} parent=27 // pred_region
        %s198 = smul.u32 64, %s18
        %p199 = scmp.lt.s32.totalorder %s17, 0
        %s200 = scalar_select %p199, %s17, 0
        %p201 = scmp.lt.s32.totalorder %s198, 255
        %s202 = scalar_select %p201, %s198, 255
        %s203 = smul.addr %s200, 256
        %s204 = sadd.s32 %s202, %s203
        %s205 = smul.addr %s204, 4
        %s206 = scalar_lea.vmem %s0, %s205
        %s207 = smul.u32 64, %s18
      $region32: #{fused_matmul.1} parent=27 // pred_fallthru
        _
    $region28: #{fused_matmul.1} parent=5 // pred_fallthru
      _
    %p208 = scmp.le.s32.totalorder 1, %s10
    %p209 = scmp.lt.s32.totalorder %s10, 5
    %p210 = pnand %p208, %p209
    %p211 = pneg %p210
    // Predicated region
    $region33: #{fused_matmul.1} parent=5 // pred_check
      _
    $region34: #{fused_matmul.1} parent=5 // pred_check_branch
      %213 = sbr.rel (%p210) target = $region36
    $region35: #{fused_matmul.1} parent=5 // pred_region
      %s214 = ssub.s32 %s10, 1
      %s215 = smul.u32 64, %s20
      %p216 = scmp.lt.s32.totalorder %s19, 0
      %s217 = scalar_select %p216, %s19, 0
      %p218 = scmp.lt.s32.totalorder %s215, 255
      %s219 = scalar_select %p218, %s215, 255
      %s220 = smul.addr %s217, 256
      %s221 = sadd.s32 %s219, %s220
      %s222 = smul.addr %s221, 4
      %s223 = scalar_lea.vmem %s0, %s222
      %p224 = pneg %p50
      %p225 = pneg %p47
      %p226 = scmp.lt.s32.totalorder %s19, 0
      %s227 = scalar_select %p226, %s19, 0
      %s228 = smul.addr %s227, 4
      %s229 = smul.addr %s228, 4
      %s230 = scalar_lea.vmem %s1, %s229
      %p231 = pneg %p76
      %p232 = pneg %p73
      %p233 = scmp.lt.s32.totalorder %s19, 0
      %s234 = scalar_select %p233, %s19, 0
      %s235 = scalar_lea.vmem %s2, %s234
      %p236 = pneg %p102
      %p237 = pneg %p99
      %p238 = scmp.lt.s32.totalorder %s19, 0
      %s239 = scalar_select %p238, %s19, 0
      %s240 = scalar_lea.vmem %s3, %s239
      %p241 = pneg %p128
      %p242 = pneg %p125
      %p243 = pneg %p156
      %p244 = pneg %p153
      %s245 = smul.u32 64, %s20
      %p246 = scmp.lt.s32.totalorder %s19, 0
      %s247 = scalar_select %p246, %s19, 0
      %p248 = scmp.lt.s32.totalorder %s245, 255
      %s249 = scalar_select %p248, %s245, 255
      %s250 = smul.addr %s247, 256
      %s251 = sadd.s32 %s249, %s250
      %s252 = smul.addr %s251, 4
      %s253 = scalar_lea.vmem %s4, %s252
      %s254 = smul.u32 64, %s20
      %p255 = scmp.lt.s32.totalorder %s19, 0
      %s256 = scalar_select %p255, %s19, 0
      %p257 = scmp.lt.s32.totalorder %s254, 255
      %s258 = scalar_select %p257, %s254, 255
      %s259 = smul.addr %s256, 256
      %s260 = sadd.s32 %s258, %s259
      %s261 = smul.addr %s260, 4
      %s262 = scalar_lea.vmem %s0, %s261
      %s263 = smul.u32 64, %s20
      %p264 = scmp.lt.s32.totalorder %s19, 0
      %s265 = scalar_select %p264, %s19, 0
      %s266 = smul.addr %s265, 4
      %s267 = smul.addr %s266, 4
      %s268 = scalar_lea.vmem %s1, %s267
      %p269 = scmp.lt.s32.totalorder %s19, 0
      %s270 = scalar_select %p269, %s19, 0
      %s271 = scalar_lea.vmem %s2, %s270
      %p272 = scmp.lt.s32.totalorder %s19, 0
      %s273 = scalar_select %p272, %s19, 0
      %s274 = scalar_lea.vmem %s3, %s273
      %s275 = smul.u32 64, %s20
      %p276 = scmp.lt.s32.totalorder %s19, 0
      %s277 = scalar_select %p276, %s19, 0
      %p278 = scmp.lt.s32.totalorder %s275, 255
      %s279 = scalar_select %p278, %s275, 255
      %s280 = smul.addr %s277, 256
      %s281 = sadd.s32 %s279, %s280
      %s282 = smul.addr %s281, 4
      %s283 = scalar_lea.vmem %s4, %s282
      %s284 = smul.u32 64, %s20
      %v286 = vld [vmem:[%s262] sm:$0xf]
      %v287 = vld [vmem:[%s262 + $0x4] sm:$0xf]
      %v288 = vld [vmem:[%s262 + $0x8] sm:$0xf]
      %v289 = vld [vmem:[%s262 + $0xc] sm:$0xf]
      %v290 = vld [vmem:[%s262 + $0x10] sm:$0xf]
      %v291 = vld [vmem:[%s262 + $0x14] sm:$0xf]
      %v292 = vld [vmem:[%s262 + $0x18] sm:$0xf]
      %v293 = vld [vmem:[%s262 + $0x1c] sm:$0xf]
      %v294 = vld [vmem:[%s262 + $0x20] sm:$0xf]
      %v295 = vld [vmem:[%s262 + $0x24] sm:$0xf]
      %v296 = vld [vmem:[%s262 + $0x28] sm:$0xf]
      %v297 = vld [vmem:[%s262 + $0x2c] sm:$0xf]
      %v298 = vld [vmem:[%s262 + $0x30] sm:$0xf]
      %v299 = vld [vmem:[%s262 + $0x34] sm:$0xf]
      %v300 = vld [vmem:[%s262 + $0x38] sm:$0xf]
      %v301 = vld [vmem:[%s262 + $0x3c] sm:$0xf]
      %v302 = vld [vmem:[%s262 + $0x40] sm:$0xf]
      %v303 = vld [vmem:[%s262 + $0x44] sm:$0xf]
      %v304 = vld [vmem:[%s262 + $0x48] sm:$0xf]
      %v305 = vld [vmem:[%s262 + $0x4c] sm:$0xf]
      %v306 = vld [vmem:[%s262 + $0x50] sm:$0xf]
      %v307 = vld [vmem:[%s262 + $0x54] sm:$0xf]
      %v308 = vld [vmem:[%s262 + $0x58] sm:$0xf]
      %v309 = vld [vmem:[%s262 + $0x5c] sm:$0xf]
      %v310 = vld [vmem:[%s262 + $0x60] sm:$0xf]
      %v311 = vld [vmem:[%s262 + $0x64] sm:$0xf]
      %v312 = vld [vmem:[%s262 + $0x68] sm:$0xf]
      %v313 = vld [vmem:[%s262 + $0x6c] sm:$0xf]
      %v314 = vld [vmem:[%s262 + $0x70] sm:$0xf]
      %v315 = vld [vmem:[%s262 + $0x74] sm:$0xf]
      %v316 = vld [vmem:[%s262 + $0x78] sm:$0xf]
      %v317 = vld [vmem:[%s262 + $0x7c] sm:$0xf]
      %v318 = vld [vmem:[%s262 + $0x80] sm:$0xf]
      %v319 = vld [vmem:[%s262 + $0x84] sm:$0xf]
      %v320 = vld [vmem:[%s262 + $0x88] sm:$0xf]
      %v321 = vld [vmem:[%s262 + $0x8c] sm:$0xf]
      %v322 = vld [vmem:[%s262 + $0x90] sm:$0xf]
      %v323 = vld [vmem:[%s262 + $0x94] sm:$0xf]
      %v324 = vld [vmem:[%s262 + $0x98] sm:$0xf]
      %v325 = vld [vmem:[%s262 + $0x9c] sm:$0xf]
      %v326 = vld [vmem:[%s262 + $0xa0] sm:$0xf]
      %v327 = vld [vmem:[%s262 + $0xa4] sm:$0xf]
      %v328 = vld [vmem:[%s262 + $0xa8] sm:$0xf]
      %v329 = vld [vmem:[%s262 + $0xac] sm:$0xf]
      %v330 = vld [vmem:[%s262 + $0xb0] sm:$0xf]
      %v331 = vld [vmem:[%s262 + $0xb4] sm:$0xf]
      %v332 = vld [vmem:[%s262 + $0xb8] sm:$0xf]
      %v333 = vld [vmem:[%s262 + $0xbc] sm:$0xf]
      %v334 = vld [vmem:[%s262 + $0xc0] sm:$0xf]
      %v335 = vld [vmem:[%s262 + $0xc4] sm:$0xf]
      %v336 = vld [vmem:[%s262 + $0xc8] sm:$0xf]
      %v337 = vld [vmem:[%s262 + $0xcc] sm:$0xf]
      %v338 = vld [vmem:[%s262 + $0xd0] sm:$0xf]
      %v339 = vld [vmem:[%s262 + $0xd4] sm:$0xf]
      %v340 = vld [vmem:[%s262 + $0xd8] sm:$0xf]
      %v341 = vld [vmem:[%s262 + $0xdc] sm:$0xf]
      %v342 = vld [vmem:[%s262 + $0xe0] sm:$0xf]
      %v343 = vld [vmem:[%s262 + $0xe4] sm:$0xf]
      %v344 = vld [vmem:[%s262 + $0xe8] sm:$0xf]
      %v345 = vld [vmem:[%s262 + $0xec] sm:$0xf]
      %v346 = vld [vmem:[%s262 + $0xf0] sm:$0xf]
      %v347 = vld [vmem:[%s262 + $0xf4] sm:$0xf]
      %v348 = vld [vmem:[%s262 + $0xf8] sm:$0xf]
      %v349 = vld [vmem:[%s262 + $0xfc] sm:$0xf]
      %v350 = vld [vmem:[%s268] sm:$0xf]
      %v351 = vld [vmem:[%s268 + $0x4] sm:$0xf]
      %v352 = vld [vmem:[%s268 + $0x8] sm:$0xf]
      %v353 = vld [vmem:[%s268 + $0xc] sm:$0x3]
      %v418 = vunpack.c.l.b16 %v286
      %v419 = vunpack.c.l.b16 %v287
      %v420 = vunpack.c.l.b16 %v288
      %v421 = vunpack.c.l.b16 %v289
      %v422 = vunpack.c.l.b16 %v290
      %v423 = vunpack.c.l.b16 %v291
      %v424 = vunpack.c.l.b16 %v292
      %v425 = vunpack.c.l.b16 %v293
      %v426 = vunpack.c.l.b16 %v294
      %v427 = vunpack.c.l.b16 %v295
      %v428 = vunpack.c.l.b16 %v296
      %v429 = vunpack.c.l.b16 %v297
      %v430 = vunpack.c.l.b16 %v298
      %v431 = vunpack.c.l.b16 %v299
      %v432 = vunpack.c.l.b16 %v300
      %v433 = vunpack.c.l.b16 %v301
      %v434 = vunpack.c.l.b16 %v302
      %v435 = vunpack.c.l.b16 %v303
      %v436 = vunpack.c.l.b16 %v304
      %v437 = vunpack.c.l.b16 %v305
      %v438 = vunpack.c.l.b16 %v306
      %v439 = vunpack.c.l.b16 %v307
      %v440 = vunpack.c.l.b16 %v308
      %v441 = vunpack.c.l.b16 %v309
      %v442 = vunpack.c.l.b16 %v310
      %v443 = vunpack.c.l.b16 %v311
      %v444 = vunpack.c.l.b16 %v312
      %v445 = vunpack.c.l.b16 %v313
      %v446 = vunpack.c.l.b16 %v314
      %v447 = vunpack.c.l.b16 %v315
      %v448 = vunpack.c.l.b16 %v316
      %v449 = vunpack.c.l.b16 %v317
      %v450 = vunpack.c.l.b16 %v318
      %v451 = vunpack.c.l.b16 %v319
      %v452 = vunpack.c.l.b16 %v320
      %v453 = vunpack.c.l.b16 %v321
      %v454 = vunpack.c.l.b16 %v322
      %v455 = vunpack.c.l.b16 %v323
      %v456 = vunpack.c.l.b16 %v324
      %v457 = vunpack.c.l.b16 %v325
      %v458 = vunpack.c.l.b16 %v326
      %v459 = vunpack.c.l.b16 %v327
      %v460 = vunpack.c.l.b16 %v328
      %v461 = vunpack.c.l.b16 %v329
      %v462 = vunpack.c.l.b16 %v330
      %v463 = vunpack.c.l.b16 %v331
      %v464 = vunpack.c.l.b16 %v332
      %v465 = vunpack.c.l.b16 %v333
      %v466 = vunpack.c.l.b16 %v334
      %v467 = vunpack.c.l.b16 %v335
      %v468 = vunpack.c.l.b16 %v336
      %v469 = vunpack.c.l.b16 %v337
      %v470 = vunpack.c.l.b16 %v338
      %v471 = vunpack.c.l.b16 %v339
      %v472 = vunpack.c.l.b16 %v340
      %v473 = vunpack.c.l.b16 %v341
      %v474 = vunpack.c.l.b16 %v342
      %v475 = vunpack.c.l.b16 %v343
      %v476 = vunpack.c.l.b16 %v344
      %v477 = vunpack.c.l.b16 %v345
      %v478 = vunpack.c.l.b16 %v346
      %v479 = vunpack.c.l.b16 %v347
      %v480 = vunpack.c.l.b16 %v348
      %v481 = vunpack.c.l.b16 %v349
      %v482 = vpack.c.b16 %v419, %v418
      %v483 = vpack.c.b16 %v421, %v420
      %v484 = vpack.c.b16 %v423, %v422
      %v485 = vpack.c.b16 %v425, %v424
      %v486 = vpack.c.b16 %v427, %v426
      %v487 = vpack.c.b16 %v429, %v428
      %v488 = vpack.c.b16 %v431, %v430
      %v489 = vpack.c.b16 %v433, %v432
      %v490 = vpack.c.b16 %v435, %v434
      %v491 = vpack.c.b16 %v437, %v436
      %v492 = vpack.c.b16 %v439, %v438
      %v493 = vpack.c.b16 %v441, %v440
      %v494 = vpack.c.b16 %v443, %v442
      %v495 = vpack.c.b16 %v445, %v444
      %v496 = vpack.c.b16 %v447, %v446
      %v497 = vpack.c.b16 %v449, %v448
      %v498 = vpack.c.b16 %v451, %v450
      %v499 = vpack.c.b16 %v453, %v452
      %v500 = vpack.c.b16 %v455, %v454
      %v501 = vpack.c.b16 %v457, %v456
      %v502 = vpack.c.b16 %v459, %v458
      %v503 = vpack.c.b16 %v461, %v460
      %v504 = vpack.c.b16 %v463, %v462
      %v505 = vpack.c.b16 %v465, %v464
      %v506 = vpack.c.b16 %v467, %v466
      %v507 = vpack.c.b16 %v469, %v468
      %v508 = vpack.c.b16 %v471, %v470
      %v509 = vpack.c.b16 %v473, %v472
      %v510 = vpack.c.b16 %v475, %v474
      %v511 = vpack.c.b16 %v477, %v476
      %v512 = vpack.c.b16 %v479, %v478
      %v513 = vpack.c.b16 %v481, %v480
      %v518 = vunpack.c.l.b16 %v350
      %v519 = vunpack.c.l.b16 %v351
      %v520 = vunpack.c.l.b16 %v352
      %v521 = vunpack.c.l.b16 %v353
      %v522 = vpack.c.b16 %v519, %v518
      %v523 = vpack.c.b16 %v521, %v520
      %vm525 = vcmask 220160
      %v527 = vsel %vm525, %v482, 0
      %v530 = vsel %vm525, %v483, 0
      %v533 = vsel %vm525, %v484, 0
      %v536 = vsel %vm525, %v485, 0
      %v539 = vsel %vm525, %v486, 0
      %v542 = vsel %vm525, %v487, 0
      %v545 = vsel %vm525, %v488, 0
      %v548 = vsel %vm525, %v489, 0
      %v551 = vsel %vm525, %v490, 0
      %v554 = vsel %vm525, %v491, 0
      %v557 = vsel %vm525, %v492, 0
      %v560 = vsel %vm525, %v493, 0
      %v563 = vsel %vm525, %v494, 0
      %v566 = vsel %vm525, %v495, 0
      %v569 = vsel %vm525, %v496, 0
      %v572 = vsel %vm525, %v497, 0
      %v575 = vsel %vm525, %v498, 0
      %v578 = vsel %vm525, %v499, 0
      %v581 = vsel %vm525, %v500, 0
      %v584 = vsel %vm525, %v501, 0
      %v587 = vsel %vm525, %v502, 0
      %v590 = vsel %vm525, %v503, 0
      %v593 = vsel %vm525, %v504, 0
      %v596 = vsel %vm525, %v505, 0
      %v599 = vsel %vm525, %v506, 0
      %v602 = vsel %vm525, %v507, 0
      %v605 = vsel %vm525, %v508, 0
      %v608 = vsel %vm525, %v509, 0
      %v611 = vsel %vm525, %v510, 0
      %v614 = vsel %vm525, %v511, 0
      %v617 = vsel %vm525, %v512, 0
      %v620 = vsel %vm525, %v513, 0
      %vm622 = vcmask 1044480
      %vm623 = vcmask 1045504
      %v624 = vsel %vm622, 4294967295, 65535
      %v625 = vsel %vm623, %v624, 0
      %v627 = vand.u32 %v523, %v625
      %629 = vmatprep.subr.bf16.mxu0 0
      %630 = vmatpush1.bf16.msra.mxu0 %v522
      %631 = vmatprep.subr.bf16.mxu0 0
      %632 = vmatpush1.bf16.msra.mxu0 %v627
      %633 = vmatprep.subr.bf16.mxu0 0
      %634 = vmatpush1.bf16.msra.mxu0 0
      %635 = vmatprep.subr.bf16.mxu0 0
      %636 = vmatpush1.bf16.msra.mxu0 0
      %637 = vmatprep.subr.bf16.mxu0 0
      %638 = vmatpush1.bf16.msra.mxu0 0
      %639 = vmatprep.subr.bf16.mxu0 0
      %640 = vmatpush1.bf16.msra.mxu0 0
      %641 = vmatprep.subr.bf16.mxu0 0
      %642 = vmatpush1.bf16.msra.mxu0 0
      %643 = vmatprep.subr.bf16.mxu0 0
      %644 = vmatpush1.bf16.msra.mxu0 0
      %645 = vmatprep.subr.bf16.mxu0 0
      %646 = vmatpush1.bf16.msra.mxu0 0
      %647 = vmatprep.subr.bf16.mxu0 0
      %648 = vmatpush1.bf16.msra.mxu0 0
      %649 = vmatprep.subr.bf16.mxu0 0
      %650 = vmatpush1.bf16.msra.mxu0 0
      %651 = vmatprep.subr.bf16.mxu0 0
      %652 = vmatpush1.bf16.msra.mxu0 0
      %653 = vmatprep.subr.bf16.mxu0 0
      %654 = vmatpush1.bf16.msra.mxu0 0
      %655 = vmatprep.subr.bf16.mxu0 0
      %656 = vmatpush1.bf16.msra.mxu0 0
      %657 = vmatprep.subr.bf16.mxu0 0
      %658 = vmatpush1.bf16.msra.mxu0 0
      %659 = vmatprep.subr.bf16.mxu0 0
      %660 = vmatpush1.bf16.msra.mxu0 0
      %661 = vmatprep.mubr.bf16.mxu0 0
      %662 = vmatmul.mubr.bf16.gmra.mrb[0].mxu0 %v527
      %v663 = vpop.f32.mrb[0].mxu0
      %v664 = vadd.f32 0.0, %v663
      %v665 = vpop.f32.mrb[0].mxu0
      %v666 = vpop.f32.mrb[0].mxu0
      %v667 = vadd.f32 0.0, %v666
      %v668 = vpop.f32.mrb[0].mxu0
      %669 = vmatprep.mubr.bf16.mxu0 0
      %670 = vmatmul.mubr.bf16.gmra.mrb[0].mxu0 %v530
      %v671 = vpop.f32.mrb[0].mxu0
      %v672 = vadd.f32 0.0, %v671
      %v673 = vpop.f32.mrb[0].mxu0
      %v674 = vpop.f32.mrb[0].mxu0
      %v675 = vadd.f32 0.0, %v674
      %v676 = vpop.f32.mrb[0].mxu0
      %677 = vmatprep.mubr.bf16.mxu0 0
      %678 = vmatmul.mubr.bf16.gmra.mrb[0].mxu0 %v533
      %v679 = vpop.f32.mrb[0].mxu0
      %v680 = vadd.f32 0.0, %v679
      %v681 = vpop.f32.mrb[0].mxu0
      %v682 = vpop.f32.mrb[0].mxu0
      %v683 = vadd.f32 0.0, %v682
      %v684 = vpop.f32.mrb[0].mxu0
      %685 = vmatprep.mubr.bf16.mxu0 0
      %686 = vmatmul.mubr.bf16.gmra.mrb[0].mxu0 %v536
      %v687 = vpop.f32.mrb[0].mxu0
      %v688 = vadd.f32 0.0, %v687
      %v689 = vpop.f32.mrb[0].mxu0
      %v690 = vpop.f32.mrb[0].mxu0
      %v691 = vadd.f32 0.0, %v690
      %v692 = vpop.f32.mrb[0].mxu0
      %693 = vmatprep.mubr.bf16.mxu0 0
      %694 = vmatmul.mubr.bf16.gmra.mrb[0].mxu0 %v539
      %v695 = vpop.f32.mrb[0].mxu0
      %v696 = vadd.f32 0.0, %v695
      %v697 = vpop.f32.mrb[0].mxu0
      %v698 = vpop.f32.mrb[0].mxu0
      %v699 = vadd.f32 0.0, %v698
      %v700 = vpop.f32.mrb[0].mxu0
      %701 = vmatprep.mubr.bf16.mxu0 0
      %702 = vmatmul.mubr.bf16.gmra.mrb[0].mxu0 %v542
      %v703 = vpop.f32.mrb[0].mxu0
      %v704 = vadd.f32 0.0, %v703
      %v705 = vpop.f32.mrb[0].mxu0
      %v706 = vpop.f32.mrb[0].mxu0
      %v707 = vadd.f32 0.0, %v706
      %v708 = vpop.f32.mrb[0].mxu0
      %709 = vmatprep.mubr.bf16.mxu0 0
      %710 = vmatmul.mubr.bf16.gmra.mrb[0].mxu0 %v545
      %v711 = vpop.f32.mrb[0].mxu0
      %v712 = vadd.f32 0.0, %v711
      %v713 = vpop.f32.mrb[0].mxu0
      %v714 = vpop.f32.mrb[0].mxu0
      %v715 = vadd.f32 0.0, %v714
      %v716 = vpop.f32.mrb[0].mxu0
      %717 = vmatprep.mubr.bf16.mxu0 0
      %718 = vmatmul.mubr.bf16.gmra.mrb[0].mxu0 %v548
      %v719 = vpop.f32.mrb[0].mxu0
      %v720 = vadd.f32 0.0, %v719
      %v721 = vpop.f32.mrb[0].mxu0
      %v722 = vpop.f32.mrb[0].mxu0
      %v723 = vadd.f32 0.0, %v722
      %v724 = vpop.f32.mrb[0].mxu0
      %725 = vmatprep.mubr.bf16.mxu0 0
      %726 = vmatmul.mubr.bf16.gmra.mrb[0].mxu0 %v551
      %v727 = vpop.f32.mrb[0].mxu0
      %v728 = vadd.f32 0.0, %v727
      %v729 = vpop.f32.mrb[0].mxu0
      %v730 = vpop.f32.mrb[0].mxu0
      %v731 = vadd.f32 0.0, %v730
      %v732 = vpop.f32.mrb[0].mxu0
      %733 = vmatprep.mubr.bf16.mxu0 0
      %734 = vmatmul.mubr.bf16.gmra.mrb[0].mxu0 %v554
      %v735 = vpop.f32.mrb[0].mxu0
      %v736 = vadd.f32 0.0, %v735
      %v737 = vpop.f32.mrb[0].mxu0
      %v738 = vpop.f32.mrb[0].mxu0
      %v739 = vadd.f32 0.0, %v738
      %v740 = vpop.f32.mrb[0].mxu0
      %741 = vmatprep.mubr.bf16.mxu0 0
      %742 = vmatmul.mubr.bf16.gmra.mrb[0].mxu0 %v557
      %v743 = vpop.f32.mrb[0].mxu0
      %v744 = vadd.f32 0.0, %v743
      %v745 = vpop.f32.mrb[0].mxu0
      %v746 = vpop.f32.mrb[0].mxu0
      %v747 = vadd.f32 0.0, %v746
      %v748 = vpop.f32.mrb[0].mxu0
      %749 = vmatprep.mubr.bf16.mxu0 0
      %750 = vmatmul.mubr.bf16.gmra.mrb[0].mxu0 %v560
      %v751 = vpop.f32.mrb[0].mxu0
      %v752 = vadd.f32 0.0, %v751
      %v753 = vpop.f32.mrb[0].mxu0
      %v754 = vpop.f32.mrb[0].mxu0
      %v755 = vadd.f32 0.0, %v754
      %v756 = vpop.f32.mrb[0].mxu0
      %757 = vmatprep.mubr.bf16.mxu0 0
      %758 = vmatmul.mubr.bf16.gmra.mrb[0].mxu0 %v563
      %v759 = vpop.f32.mrb[0].mxu0
      %v760 = vadd.f32 0.0, %v759
      %v761 = vpop.f32.mrb[0].mxu0
      %v762 = vpop.f32.mrb[0].mxu0
      %v763 = vadd.f32 0.0, %v762
      %v764 = vpop.f32.mrb[0].mxu0
      %765 = vmatprep.mubr.bf16.mxu0 0
      %766 = vmatmul.mubr.bf16.gmra.mrb[0].mxu0 %v566
      %v767 = vpop.f32.mrb[0].mxu0
      %v768 = vadd.f32 0.0, %v767
      %v769 = vpop.f32.mrb[0].mxu0
      %v770 = vpop.f32.mrb[0].mxu0
      %v771 = vadd.f32 0.0, %v770
      %v772 = vpop.f32.mrb[0].mxu0
      %773 = vmatprep.mubr.bf16.mxu0 0
      %774 = vmatmul.mubr.bf16.gmra.mrb[0].mxu0 %v569
      %v775 = vpop.f32.mrb[0].mxu0
      %v776 = vadd.f32 0.0, %v775
      %v777 = vpop.f32.mrb[0].mxu0
      %v778 = vpop.f32.mrb[0].mxu0
      %v779 = vadd.f32 0.0, %v778
      %v780 = vpop.f32.mrb[0].mxu0
      %781 = vmatprep.mubr.bf16.mxu0 0
      %782 = vmatmul.mubr.bf16.gmra.mrb[0].mxu0 %v572
      %v783 = vpop.f32.mrb[0].mxu0
      %v784 = vadd.f32 0.0, %v783
      %v785 = vpop.f32.mrb[0].mxu0
      %v786 = vpop.f32.mrb[0].mxu0
      %v787 = vadd.f32 0.0, %v786
      %v788 = vpop.f32.mrb[0].mxu0
      %789 = vmatprep.mubr.bf16.mxu0 0
      %790 = vmatmul.mubr.bf16.gmra.mrb[0].mxu0 %v575
      %v791 = vpop.f32.mrb[0].mxu0
      %v792 = vadd.f32 0.0, %v791
      %v793 = vpop.f32.mrb[0].mxu0
      %v794 = vpop.f32.mrb[0].mxu0
      %v795 = vadd.f32 0.0, %v794
      %v796 = vpop.f32.mrb[0].mxu0
      %797 = vmatprep.mubr.bf16.mxu0 0
      %798 = vmatmul.mubr.bf16.gmra.mrb[0].mxu0 %v578
      %v799 = vpop.f32.mrb[0].mxu0
      %v800 = vadd.f32 0.0, %v799
      %v801 = vpop.f32.mrb[0].mxu0
      %v802 = vpop.f32.mrb[0].mxu0
      %v803 = vadd.f32 0.0, %v802
      %v804 = vpop.f32.mrb[0].mxu0
      %805 = vmatprep.mubr.bf16.mxu0 0
      %806 = vmatmul.mubr.bf16.gmra.mrb[0].mxu0 %v581
      %v807 = vpop.f32.mrb[0].mxu0
      %v808 = vadd.f32 0.0, %v807
      %v809 = vpop.f32.mrb[0].mxu0
      %v810 = vpop.f32.mrb[0].mxu0
      %v811 = vadd.f32 0.0, %v810
      %v812 = vpop.f32.mrb[0].mxu0
      %813 = vmatprep.mubr.bf16.mxu0 0
      %814 = vmatmul.mubr.bf16.gmra.mrb[0].mxu0 %v584
      %v815 = vpop.f32.mrb[0].mxu0
      %v816 = vadd.f32 0.0, %v815
      %v817 = vpop.f32.mrb[0].mxu0
      %v818 = vpop.f32.mrb[0].mxu0
      %v819 = vadd.f32 0.0, %v818
      %v820 = vpop.f32.mrb[0].mxu0
      %821 = vmatprep.mubr.bf16.mxu0 0
      %822 = vmatmul.mubr.bf16.gmra.mrb[0].mxu0 %v587
      %v823 = vpop.f32.mrb[0].mxu0
      %v824 = vadd.f32 0.0, %v823
      %v825 = vpop.f32.mrb[0].mxu0
      %v826 = vpop.f32.mrb[0].mxu0
      %v827 = vadd.f32 0.0, %v826
      %v828 = vpop.f32.mrb[0].mxu0
      %829 = vmatprep.mubr.bf16.mxu0 0
      %830 = vmatmul.mubr.bf16.gmra.mrb[0].mxu0 %v590
      %v831 = vpop.f32.mrb[0].mxu0
      %v832 = vadd.f32 0.0, %v831
      %v833 = vpop.f32.mrb[0].mxu0
      %v834 = vpop.f32.mrb[0].mxu0
      %v835 = vadd.f32 0.0, %v834
      %v836 = vpop.f32.mrb[0].mxu0
      %837 = vmatprep.mubr.bf16.mxu0 0
      %838 = vmatmul.mubr.bf16.gmra.mrb[0].mxu0 %v593
      %v839 = vpop.f32.mrb[0].mxu0
      %v840 = vadd.f32 0.0, %v839
      %v841 = vpop.f32.mrb[0].mxu0
      %v842 = vpop.f32.mrb[0].mxu0
      %v843 = vadd.f32 0.0, %v842
      %v844 = vpop.f32.mrb[0].mxu0
      %845 = vmatprep.mubr.bf16.mxu0 0
      %846 = vmatmul.mubr.bf16.gmra.mrb[0].mxu0 %v596
      %v847 = vpop.f32.mrb[0].mxu0
      %v848 = vadd.f32 0.0, %v847
      %v849 = vpop.f32.mrb[0].mxu0
      %v850 = vpop.f32.mrb[0].mxu0
      %v851 = vadd.f32 0.0, %v850
      %v852 = vpop.f32.mrb[0].mxu0
      %853 = vmatprep.mubr.bf16.mxu0 0
      %854 = vmatmul.mubr.bf16.gmra.mrb[0].mxu0 %v599
      %v855 = vpop.f32.mrb[0].mxu0
      %v856 = vadd.f32 0.0, %v855
      %v857 = vpop.f32.mrb[0].mxu0
      %v858 = vpop.f32.mrb[0].mxu0
      %v859 = vadd.f32 0.0, %v858
      %v860 = vpop.f32.mrb[0].mxu0
      %861 = vmatprep.mubr.bf16.mxu0 0
      %862 = vmatmul.mubr.bf16.gmra.mrb[0].mxu0 %v602
      %v863 = vpop.f32.mrb[0].mxu0
      %v864 = vadd.f32 0.0, %v863
      %v865 = vpop.f32.mrb[0].mxu0
      %v866 = vpop.f32.mrb[0].mxu0
      %v867 = vadd.f32 0.0, %v866
      %v868 = vpop.f32.mrb[0].mxu0
      %869 = vmatprep.mubr.bf16.mxu0 0
      %870 = vmatmul.mubr.bf16.gmra.mrb[0].mxu0 %v605
      %v871 = vpop.f32.mrb[0].mxu0
      %v872 = vadd.f32 0.0, %v871
      %v873 = vpop.f32.mrb[0].mxu0
      %v874 = vpop.f32.mrb[0].mxu0
      %v875 = vadd.f32 0.0, %v874
      %v876 = vpop.f32.mrb[0].mxu0
      %877 = vmatprep.mubr.bf16.mxu0 0
      %878 = vmatmul.mubr.bf16.gmra.mrb[0].mxu0 %v608
      %v879 = vpop.f32.mrb[0].mxu0
      %v880 = vadd.f32 0.0, %v879
      %v881 = vpop.f32.mrb[0].mxu0
      %v882 = vpop.f32.mrb[0].mxu0
      %v883 = vadd.f32 0.0, %v882
      %v884 = vpop.f32.mrb[0].mxu0
      %885 = vmatprep.mubr.bf16.mxu0 0
      %886 = vmatmul.mubr.bf16.gmra.mrb[0].mxu0 %v611
      %v887 = vpop.f32.mrb[0].mxu0
      %v888 = vadd.f32 0.0, %v887
      %v889 = vpop.f32.mrb[0].mxu0
      %v890 = vpop.f32.mrb[0].mxu0
      %v891 = vadd.f32 0.0, %v890
      %v892 = vpop.f32.mrb[0].mxu0
      %893 = vmatprep.mubr.bf16.mxu0 0
      %894 = vmatmul.mubr.bf16.gmra.mrb[0].mxu0 %v614
      %v895 = vpop.f32.mrb[0].mxu0
      %v896 = vadd.f32 0.0, %v895
      %v897 = vpop.f32.mrb[0].mxu0
      %v898 = vpop.f32.mrb[0].mxu0
      %v899 = vadd.f32 0.0, %v898
      %v900 = vpop.f32.mrb[0].mxu0
      %901 = vmatprep.mubr.bf16.mxu0 0
      %902 = vmatmul.mubr.bf16.gmra.mrb[0].mxu0 %v617
      %v903 = vpop.f32.mrb[0].mxu0
      %v904 = vadd.f32 0.0, %v903
      %v905 = vpop.f32.mrb[0].mxu0
      %v906 = vpop.f32.mrb[0].mxu0
      %v907 = vadd.f32 0.0, %v906
      %v908 = vpop.f32.mrb[0].mxu0
      %909 = vmatprep.mubr.bf16.mxu0 0
      %910 = vmatmul.mubr.bf16.gmra.mrb[0].mxu0 %v620
      %v911 = vpop.f32.mrb[0].mxu0
      %v912 = vadd.f32 0.0, %v911
      %v913 = vpop.f32.mrb[0].mxu0
      %v914 = vpop.f32.mrb[0].mxu0
      %v915 = vadd.f32 0.0, %v914
      %v916 = vpop.f32.mrb[0].mxu0
      %917 = vdwg.mxu0
      %v918 = vld [vmem:[%s271] sm:$0x1]
      %v920 = vlaneseq
      %v921 = vshrl.u32 %v920, 7
      %v922 = vsub.s32 0, %v921
      %v923 = vrot.slane %v918, %v922
      %v925 = vmul.f32 %v664, %v923
      %v926 = vmul.f32 %v667, %v923
      %v927 = vmul.f32 %v672, %v923
      %v928 = vmul.f32 %v675, %v923
      %v929 = vmul.f32 %v680, %v923
      %v930 = vmul.f32 %v683, %v923
      %v931 = vmul.f32 %v688, %v923
      %v932 = vmul.f32 %v691, %v923
      %v933 = vmul.f32 %v696, %v923
      %v934 = vmul.f32 %v699, %v923
      %v935 = vmul.f32 %v704, %v923
      %v936 = vmul.f32 %v707, %v923
      %v937 = vmul.f32 %v712, %v923
      %v938 = vmul.f32 %v715, %v923
      %v939 = vmul.f32 %v720, %v923
      %v940 = vmul.f32 %v723, %v923
      %v941 = vmul.f32 %v728, %v923
      %v942 = vmul.f32 %v731, %v923
      %v943 = vmul.f32 %v736, %v923
      %v944 = vmul.f32 %v739, %v923
      %v945 = vmul.f32 %v744, %v923
      %v946 = vmul.f32 %v747, %v923
      %v947 = vmul.f32 %v752, %v923
      %v948 = vmul.f32 %v755, %v923
      %v949 = vmul.f32 %v760, %v923
      %v950 = vmul.f32 %v763, %v923
      %v951 = vmul.f32 %v768, %v923
      %v952 = vmul.f32 %v771, %v923
      %v953 = vmul.f32 %v776, %v923
      %v954 = vmul.f32 %v779, %v923
      %v955 = vmul.f32 %v784, %v923
      %v956 = vmul.f32 %v787, %v923
      %v957 = vmul.f32 %v792, %v923
      %v958 = vmul.f32 %v795, %v923
      %v959 = vmul.f32 %v800, %v923
      %v960 = vmul.f32 %v803, %v923
      %v961 = vmul.f32 %v808, %v923
      %v962 = vmul.f32 %v811, %v923
      %v963 = vmul.f32 %v816, %v923
      %v964 = vmul.f32 %v819, %v923
      %v965 = vmul.f32 %v824, %v923
      %v966 = vmul.f32 %v827, %v923
      %v967 = vmul.f32 %v832, %v923
      %v968 = vmul.f32 %v835, %v923
      %v969 = vmul.f32 %v840, %v923
      %v970 = vmul.f32 %v843, %v923
      %v971 = vmul.f32 %v848, %v923
      %v972 = vmul.f32 %v851, %v923
      %v973 = vmul.f32 %v856, %v923
      %v974 = vmul.f32 %v859, %v923
      %v975 = vmul.f32 %v864, %v923
      %v976 = vmul.f32 %v867, %v923
      %v977 = vmul.f32 %v872, %v923
      %v978 = vmul.f32 %v875, %v923
      %v979 = vmul.f32 %v880, %v923
      %v980 = vmul.f32 %v883, %v923
      %v981 = vmul.f32 %v888, %v923
      %v982 = vmul.f32 %v891, %v923
      %v983 = vmul.f32 %v896, %v923
      %v984 = vmul.f32 %v899, %v923
      %v985 = vmul.f32 %v904, %v923
      %v986 = vmul.f32 %v907, %v923
      %v987 = vmul.f32 %v912, %v923
      %v988 = vmul.f32 %v915, %v923
      %v989 = vld [vmem:[%s274] sm:$0x1]
      %v991 = vlaneseq
      %v992 = vshrl.u32 %v991, 7
      %v993 = vsub.s32 0, %v992
      %v994 = vrot.slane %v989, %v993
      %v996 = vadd.f32 %v925, %v994
      %v997 = vadd.f32 %v926, %v994
      %v998 = vadd.f32 %v927, %v994
      %v999 = vadd.f32 %v928, %v994
      %v1000 = vadd.f32 %v929, %v994
      %v1001 = vadd.f32 %v930, %v994
      %v1002 = vadd.f32 %v931, %v994
      %v1003 = vadd.f32 %v932, %v994
      %v1004 = vadd.f32 %v933, %v994
      %v1005 = vadd.f32 %v934, %v994
      %v1006 = vadd.f32 %v935, %v994
      %v1007 = vadd.f32 %v936, %v994
      %v1008 = vadd.f32 %v937, %v994
      %v1009 = vadd.f32 %v938, %v994
      %v1010 = vadd.f32 %v939, %v994
      %v1011 = vadd.f32 %v940, %v994
      %v1012 = vadd.f32 %v941, %v994
      %v1013 = vadd.f32 %v942, %v994
      %v1014 = vadd.f32 %v943, %v994
      %v1015 = vadd.f32 %v944, %v994
      %v1016 = vadd.f32 %v945, %v994
      %v1017 = vadd.f32 %v946, %v994
      %v1018 = vadd.f32 %v947, %v994
      %v1019 = vadd.f32 %v948, %v994
      %v1020 = vadd.f32 %v949, %v994
      %v1021 = vadd.f32 %v950, %v994
      %v1022 = vadd.f32 %v951, %v994
      %v1023 = vadd.f32 %v952, %v994
      %v1024 = vadd.f32 %v953, %v994
      %v1025 = vadd.f32 %v954, %v994
      %v1026 = vadd.f32 %v955, %v994
      %v1027 = vadd.f32 %v956, %v994
      %v1028 = vadd.f32 %v957, %v994
      %v1029 = vadd.f32 %v958, %v994
      %v1030 = vadd.f32 %v959, %v994
      %v1031 = vadd.f32 %v960, %v994
      %v1032 = vadd.f32 %v961, %v994
      %v1033 = vadd.f32 %v962, %v994
      %v1034 = vadd.f32 %v963, %v994
      %v1035 = vadd.f32 %v964, %v994
      %v1036 = vadd.f32 %v965, %v994
      %v1037 = vadd.f32 %v966, %v994
      %v1038 = vadd.f32 %v967, %v994
      %v1039 = vadd.f32 %v968, %v994
      %v1040 = vadd.f32 %v969, %v994
      %v1041 = vadd.f32 %v970, %v994
      %v1042 = vadd.f32 %v971, %v994
      %v1043 = vadd.f32 %v972, %v994
      %v1044 = vadd.f32 %v973, %v994
      %v1045 = vadd.f32 %v974, %v994
      %v1046 = vadd.f32 %v975, %v994
      %v1047 = vadd.f32 %v976, %v994
      %v1048 = vadd.f32 %v977, %v994
      %v1049 = vadd.f32 %v978, %v994
      %v1050 = vadd.f32 %v979, %v994
      %v1051 = vadd.f32 %v980, %v994
      %v1052 = vadd.f32 %v981, %v994
      %v1053 = vadd.f32 %v982, %v994
      %v1054 = vadd.f32 %v983, %v994
      %v1055 = vadd.f32 %v984, %v994
      %v1056 = vadd.f32 %v985, %v994
      %v1057 = vadd.f32 %v986, %v994
      %v1058 = vadd.f32 %v987, %v994
      %v1059 = vadd.f32 %v988, %v994
      %v1060 = vmax.f32 %v996, 0.0
      %v1061 = vmax.f32 %v997, 0.0
      %v1062 = vmax.f32 %v998, 0.0
      %v1063 = vmax.f32 %v999, 0.0
      %v1064 = vmax.f32 %v1000, 0.0
      %v1065 = vmax.f32 %v1001, 0.0
      %v1066 = vmax.f32 %v1002, 0.0
      %v1067 = vmax.f32 %v1003, 0.0
      %v1068 = vmax.f32 %v1004, 0.0
      %v1069 = vmax.f32 %v1005, 0.0
      %v1070 = vmax.f32 %v1006, 0.0
      %v1071 = vmax.f32 %v1007, 0.0
      %v1072 = vmax.f32 %v1008, 0.0
      %v1073 = vmax.f32 %v1009, 0.0
      %v1074 = vmax.f32 %v1010, 0.0
      %v1075 = vmax.f32 %v1011, 0.0
      %v1076 = vmax.f32 %v1012, 0.0
      %v1077 = vmax.f32 %v1013, 0.0
      %v1078 = vmax.f32 %v1014, 0.0
      %v1079 = vmax.f32 %v1015, 0.0
      %v1080 = vmax.f32 %v1016, 0.0
      %v1081 = vmax.f32 %v1017, 0.0
      %v1082 = vmax.f32 %v1018, 0.0
      %v1083 = vmax.f32 %v1019, 0.0
      %v1084 = vmax.f32 %v1020, 0.0
      %v1085 = vmax.f32 %v1021, 0.0
      %v1086 = vmax.f32 %v1022, 0.0
      %v1087 = vmax.f32 %v1023, 0.0
      %v1088 = vmax.f32 %v1024, 0.0
      %v1089 = vmax.f32 %v1025, 0.0
      %v1090 = vmax.f32 %v1026, 0.0
      %v1091 = vmax.f32 %v1027, 0.0
      %v1092 = vmax.f32 %v1028, 0.0
      %v1093 = vmax.f32 %v1029, 0.0
      %v1094 = vmax.f32 %v1030, 0.0
      %v1095 = vmax.f32 %v1031, 0.0
      %v1096 = vmax.f32 %v1032, 0.0
      %v1097 = vmax.f32 %v1033, 0.0
      %v1098 = vmax.f32 %v1034, 0.0
      %v1099 = vmax.f32 %v1035, 0.0
      %v1100 = vmax.f32 %v1036, 0.0
      %v1101 = vmax.f32 %v1037, 0.0
      %v1102 = vmax.f32 %v1038, 0.0
      %v1103 = vmax.f32 %v1039, 0.0
      %v1104 = vmax.f32 %v1040, 0.0
      %v1105 = vmax.f32 %v1041, 0.0
      %v1106 = vmax.f32 %v1042, 0.0
      %v1107 = vmax.f32 %v1043, 0.0
      %v1108 = vmax.f32 %v1044, 0.0
      %v1109 = vmax.f32 %v1045, 0.0
      %v1110 = vmax.f32 %v1046, 0.0
      %v1111 = vmax.f32 %v1047, 0.0
      %v1112 = vmax.f32 %v1048, 0.0
      %v1113 = vmax.f32 %v1049, 0.0
      %v1114 = vmax.f32 %v1050, 0.0
      %v1115 = vmax.f32 %v1051, 0.0
      %v1116 = vmax.f32 %v1052, 0.0
      %v1117 = vmax.f32 %v1053, 0.0
      %v1118 = vmax.f32 %v1054, 0.0
      %v1119 = vmax.f32 %v1055, 0.0
      %v1120 = vmax.f32 %v1056, 0.0
      %v1121 = vmax.f32 %v1057, 0.0
      %v1122 = vmax.f32 %v1058, 0.0
      %v1123 = vmax.f32 %v1059, 0.0
      %v1124 = vpack.c.bf16 %v1061, %v1060
      %v1125 = vpack.c.bf16 %v1063, %v1062
      %v1126 = vpack.c.bf16 %v1065, %v1064
      %v1127 = vpack.c.bf16 %v1067, %v1066
      %v1128 = vpack.c.bf16 %v1069, %v1068
      %v1129 = vpack.c.bf16 %v1071, %v1070
      %v1130 = vpack.c.bf16 %v1073, %v1072
      %v1131 = vpack.c.bf16 %v1075, %v1074
      %v1132 = vpack.c.bf16 %v1077, %v1076
      %v1133 = vpack.c.bf16 %v1079, %v1078
      %v1134 = vpack.c.bf16 %v1081, %v1080
      %v1135 = vpack.c.bf16 %v1083, %v1082
      %v1136 = vpack.c.bf16 %v1085, %v1084
      %v1137 = vpack.c.bf16 %v1087, %v1086
      %v1138 = vpack.c.bf16 %v1089, %v1088
      %v1139 = vpack.c.bf16 %v1091, %v1090
      %v1140 = vpack.c.bf16 %v1093, %v1092
      %v1141 = vpack.c.bf16 %v1095, %v1094
      %v1142 = vpack.c.bf16 %v1097, %v1096
      %v1143 = vpack.c.bf16 %v1099, %v1098
      %v1144 = vpack.c.bf16 %v1101, %v1100
      %v1145 = vpack.c.bf16 %v1103, %v1102
      %v1146 = vpack.c.bf16 %v1105, %v1104
      %v1147 = vpack.c.bf16 %v1107, %v1106
      %v1148 = vpack.c.bf16 %v1109, %v1108
      %v1149 = vpack.c.bf16 %v1111, %v1110
      %v1150 = vpack.c.bf16 %v1113, %v1112
      %v1151 = vpack.c.bf16 %v1115, %v1114
      %v1152 = vpack.c.bf16 %v1117, %v1116
      %v1153 = vpack.c.bf16 %v1119, %v1118
      %v1154 = vpack.c.bf16 %v1121, %v1120
      %v1155 = vpack.c.bf16 %v1123, %v1122
      %v1188 = vunpack.c.l.b16 %v1124
      %v1189 = vunpack.c.h.b16 %v1124
      %v1190 = vunpack.c.l.b16 %v1125
      %v1191 = vunpack.c.h.b16 %v1125
      %v1192 = vunpack.c.l.b16 %v1126
      %v1193 = vunpack.c.h.b16 %v1126
      %v1194 = vunpack.c.l.b16 %v1127
      %v1195 = vunpack.c.h.b16 %v1127
      %v1196 = vunpack.c.l.b16 %v1128
      %v1197 = vunpack.c.h.b16 %v1128
      %v1198 = vunpack.c.l.b16 %v1129
      %v1199 = vunpack.c.h.b16 %v1129
      %v1200 = vunpack.c.l.b16 %v1130
      %v1201 = vunpack.c.h.b16 %v1130
      %v1202 = vunpack.c.l.b16 %v1131
      %v1203 = vunpack.c.h.b16 %v1131
      %v1204 = vunpack.c.l.b16 %v1132
      %v1205 = vunpack.c.h.b16 %v1132
      %v1206 = vunpack.c.l.b16 %v1133
      %v1207 = vunpack.c.h.b16 %v1133
      %v1208 = vunpack.c.l.b16 %v1134
      %v1209 = vunpack.c.h.b16 %v1134
      %v1210 = vunpack.c.l.b16 %v1135
      %v1211 = vunpack.c.h.b16 %v1135
      %v1212 = vunpack.c.l.b16 %v1136
      %v1213 = vunpack.c.h.b16 %v1136
      %v1214 = vunpack.c.l.b16 %v1137
      %v1215 = vunpack.c.h.b16 %v1137
      %v1216 = vunpack.c.l.b16 %v1138
      %v1217 = vunpack.c.h.b16 %v1138
      %v1218 = vunpack.c.l.b16 %v1139
      %v1219 = vunpack.c.h.b16 %v1139
      %v1220 = vunpack.c.l.b16 %v1140
      %v1221 = vunpack.c.h.b16 %v1140
      %v1222 = vunpack.c.l.b16 %v1141
      %v1223 = vunpack.c.h.b16 %v1141
      %v1224 = vunpack.c.l.b16 %v1142
      %v1225 = vunpack.c.h.b16 %v1142
      %v1226 = vunpack.c.l.b16 %v1143
      %v1227 = vunpack.c.h.b16 %v1143
      %v1228 = vunpack.c.l.b16 %v1144
      %v1229 = vunpack.c.h.b16 %v1144
      %v1230 = vunpack.c.l.b16 %v1145
      %v1231 = vunpack.c.h.b16 %v1145
      %v1232 = vunpack.c.l.b16 %v1146
      %v1233 = vunpack.c.h.b16 %v1146
      %v1234 = vunpack.c.l.b16 %v1147
      %v1235 = vunpack.c.h.b16 %v1147
      %v1236 = vunpack.c.l.b16 %v1148
      %v1237 = vunpack.c.h.b16 %v1148
      %v1238 = vunpack.c.l.b16 %v1149
      %v1239 = vunpack.c.h.b16 %v1149
      %v1240 = vunpack.c.l.b16 %v1150
      %v1241 = vunpack.c.h.b16 %v1150
      %v1242 = vunpack.c.l.b16 %v1151
      %v1243 = vunpack.c.h.b16 %v1151
      %v1244 = vunpack.c.l.b16 %v1152
      %v1245 = vunpack.c.h.b16 %v1152
      %v1246 = vunpack.c.l.b16 %v1153
      %v1247 = vunpack.c.h.b16 %v1153
      %v1248 = vunpack.c.l.b16 %v1154
      %v1249 = vunpack.c.h.b16 %v1154
      %v1250 = vunpack.c.l.b16 %v1155
      %v1251 = vunpack.c.h.b16 %v1155
      %v1252 = vpack.c.b16 %v1188, %v1188
      %v1253 = vpack.c.b16 %v1189, %v1189
      %v1254 = vpack.c.b16 %v1190, %v1190
      %v1255 = vpack.c.b16 %v1191, %v1191
      %v1256 = vpack.c.b16 %v1192, %v1192
      %v1257 = vpack.c.b16 %v1193, %v1193
      %v1258 = vpack.c.b16 %v1194, %v1194
      %v1259 = vpack.c.b16 %v1195, %v1195
      %v1260 = vpack.c.b16 %v1196, %v1196
      %v1261 = vpack.c.b16 %v1197, %v1197
      %v1262 = vpack.c.b16 %v1198, %v1198
      %v1263 = vpack.c.b16 %v1199, %v1199
      %v1264 = vpack.c.b16 %v1200, %v1200
      %v1265 = vpack.c.b16 %v1201, %v1201
      %v1266 = vpack.c.b16 %v1202, %v1202
      %v1267 = vpack.c.b16 %v1203, %v1203
      %v1268 = vpack.c.b16 %v1204, %v1204
      %v1269 = vpack.c.b16 %v1205, %v1205
      %v1270 = vpack.c.b16 %v1206, %v1206
      %v1271 = vpack.c.b16 %v1207, %v1207
      %v1272 = vpack.c.b16 %v1208, %v1208
      %v1273 = vpack.c.b16 %v1209, %v1209
      %v1274 = vpack.c.b16 %v1210, %v1210
      %v1275 = vpack.c.b16 %v1211, %v1211
      %v1276 = vpack.c.b16 %v1212, %v1212
      %v1277 = vpack.c.b16 %v1213, %v1213
      %v1278 = vpack.c.b16 %v1214, %v1214
      %v1279 = vpack.c.b16 %v1215, %v1215
      %v1280 = vpack.c.b16 %v1216, %v1216
      %v1281 = vpack.c.b16 %v1217, %v1217
      %v1282 = vpack.c.b16 %v1218, %v1218
      %v1283 = vpack.c.b16 %v1219, %v1219
      %v1284 = vpack.c.b16 %v1220, %v1220
      %v1285 = vpack.c.b16 %v1221, %v1221
      %v1286 = vpack.c.b16 %v1222, %v1222
      %v1287 = vpack.c.b16 %v1223, %v1223
      %v1288 = vpack.c.b16 %v1224, %v1224
      %v1289 = vpack.c.b16 %v1225, %v1225
      %v1290 = vpack.c.b16 %v1226, %v1226
      %v1291 = vpack.c.b16 %v1227, %v1227
      %v1292 = vpack.c.b16 %v1228, %v1228
      %v1293 = vpack.c.b16 %v1229, %v1229
      %v1294 = vpack.c.b16 %v1230, %v1230
      %v1295 = vpack.c.b16 %v1231, %v1231
      %v1296 = vpack.c.b16 %v1232, %v1232
      %v1297 = vpack.c.b16 %v1233, %v1233
      %v1298 = vpack.c.b16 %v1234, %v1234
      %v1299 = vpack.c.b16 %v1235, %v1235
      %v1300 = vpack.c.b16 %v1236, %v1236
      %v1301 = vpack.c.b16 %v1237, %v1237
      %v1302 = vpack.c.b16 %v1238, %v1238
      %v1303 = vpack.c.b16 %v1239, %v1239
      %v1304 = vpack.c.b16 %v1240, %v1240
      %v1305 = vpack.c.b16 %v1241, %v1241
      %v1306 = vpack.c.b16 %v1242, %v1242
      %v1307 = vpack.c.b16 %v1243, %v1243
      %v1308 = vpack.c.b16 %v1244, %v1244
      %v1309 = vpack.c.b16 %v1245, %v1245
      %v1310 = vpack.c.b16 %v1246, %v1246
      %v1311 = vpack.c.b16 %v1247, %v1247
      %v1312 = vpack.c.b16 %v1248, %v1248
      %v1313 = vpack.c.b16 %v1249, %v1249
      %v1314 = vpack.c.b16 %v1250, %v1250
      %v1315 = vpack.c.b16 %v1251, %v1251
      %vm1380 = vcmask 257024
      %1381 = vst.msk [vmem:[%s283] sm:$0xf] %vm1380, %v1252
      %1382 = vst.msk [vmem:[%s283 + $0x4] sm:$0xf] %vm1380, %v1253
      %1383 = vst.msk [vmem:[%s283 + $0x8] sm:$0xf] %vm1380, %v1254
      %1384 = vst.msk [vmem:[%s283 + $0xc] sm:$0xf] %vm1380, %v1255
      %1385 = vst.msk [vmem:[%s283 + $0x10] sm:$0xf] %vm1380, %v1256
      %1386 = vst.msk [vmem:[%s283 + $0x14] sm:$0xf] %vm1380, %v1257
      %1387 = vst.msk [vmem:[%s283 + $0x18] sm:$0xf] %vm1380, %v1258
      %1388 = vst.msk [vmem:[%s283 + $0x1c] sm:$0xf] %vm1380, %v1259
      %1389 = vst.msk [vmem:[%s283 + $0x20] sm:$0xf] %vm1380, %v1260
      %1390 = vst.msk [vmem:[%s283 + $0x24] sm:$0xf] %vm1380, %v1261
      %1391 = vst.msk [vmem:[%s283 + $0x28] sm:$0xf] %vm1380, %v1262
      %1392 = vst.msk [vmem:[%s283 + $0x2c] sm:$0xf] %vm1380, %v1263
      %1393 = vst.msk [vmem:[%s283 + $0x30] sm:$0xf] %vm1380, %v1264
      %1394 = vst.msk [vmem:[%s283 + $0x34] sm:$0xf] %vm1380, %v1265
      %1395 = vst.msk [vmem:[%s283 + $0x38] sm:$0xf] %vm1380, %v1266
      %1396 = vst.msk [vmem:[%s283 + $0x3c] sm:$0xf] %vm1380, %v1267
      %1397 = vst.msk [vmem:[%s283 + $0x40] sm:$0xf] %vm1380, %v1268
      %1398 = vst.msk [vmem:[%s283 + $0x44] sm:$0xf] %vm1380, %v1269
      %1399 = vst.msk [vmem:[%s283 + $0x48] sm:$0xf] %vm1380, %v1270
      %1400 = vst.msk [vmem:[%s283 + $0x4c] sm:$0xf] %vm1380, %v1271
      %1401 = vst.msk [vmem:[%s283 + $0x50] sm:$0xf] %vm1380, %v1272
      %1402 = vst.msk [vmem:[%s283 + $0x54] sm:$0xf] %vm1380, %v1273
      %1403 = vst.msk [vmem:[%s283 + $0x58] sm:$0xf] %vm1380, %v1274
      %1404 = vst.msk [vmem:[%s283 + $0x5c] sm:$0xf] %vm1380, %v1275
      %1405 = vst.msk [vmem:[%s283 + $0x60] sm:$0xf] %vm1380, %v1276
      %1406 = vst.msk [vmem:[%s283 + $0x64] sm:$0xf] %vm1380, %v1277
      %1407 = vst.msk [vmem:[%s283 + $0x68] sm:$0xf] %vm1380, %v1278
      %1408 = vst.msk [vmem:[%s283 + $0x6c] sm:$0xf] %vm1380, %v1279
      %1409 = vst.msk [vmem:[%s283 + $0x70] sm:$0xf] %vm1380, %v1280
      %1410 = vst.msk [vmem:[%s283 + $0x74] sm:$0xf] %vm1380, %v1281
      %1411 = vst.msk [vmem:[%s283 + $0x78] sm:$0xf] %vm1380, %v1282
      %1412 = vst.msk [vmem:[%s283 + $0x7c] sm:$0xf] %vm1380, %v1283
      %1413 = vst.msk [vmem:[%s283 + $0x80] sm:$0xf] %vm1380, %v1284
      %1414 = vst.msk [vmem:[%s283 + $0x84] sm:$0xf] %vm1380, %v1285
      %1415 = vst.msk [vmem:[%s283 + $0x88] sm:$0xf] %vm1380, %v1286
      %1416 = vst.msk [vmem:[%s283 + $0x8c] sm:$0xf] %vm1380, %v1287
      %1417 = vst.msk [vmem:[%s283 + $0x90] sm:$0xf] %vm1380, %v1288
      %1418 = vst.msk [vmem:[%s283 + $0x94] sm:$0xf] %vm1380, %v1289
      %1419 = vst.msk [vmem:[%s283 + $0x98] sm:$0xf] %vm1380, %v1290
      %1420 = vst.msk [vmem:[%s283 + $0x9c] sm:$0xf] %vm1380, %v1291
      %1421 = vst.msk [vmem:[%s283 + $0xa0] sm:$0xf] %vm1380, %v1292
      %1422 = vst.msk [vmem:[%s283 + $0xa4] sm:$0xf] %vm1380, %v1293
      %1423 = vst.msk [vmem:[%s283 + $0xa8] sm:$0xf] %vm1380, %v1294
      %1424 = vst.msk [vmem:[%s283 + $0xac] sm:$0xf] %vm1380, %v1295
      %1425 = vst.msk [vmem:[%s283 + $0xb0] sm:$0xf] %vm1380, %v1296
      %1426 = vst.msk [vmem:[%s283 + $0xb4] sm:$0xf] %vm1380, %v1297
      %1427 = vst.msk [vmem:[%s283 + $0xb8] sm:$0xf] %vm1380, %v1298
      %1428 = vst.msk [vmem:[%s283 + $0xbc] sm:$0xf] %vm1380, %v1299
      %1429 = vst.msk [vmem:[%s283 + $0xc0] sm:$0xf] %vm1380, %v1300
      %1430 = vst.msk [vmem:[%s283 + $0xc4] sm:$0xf] %vm1380, %v1301
      %1431 = vst.msk [vmem:[%s283 + $0xc8] sm:$0xf] %vm1380, %v1302
      %1432 = vst.msk [vmem:[%s283 + $0xcc] sm:$0xf] %vm1380, %v1303
      %1433 = vst.msk [vmem:[%s283 + $0xd0] sm:$0xf] %vm1380, %v1304
      %1434 = vst.msk [vmem:[%s283 + $0xd4] sm:$0xf] %vm1380, %v1305
      %1435 = vst.msk [vmem:[%s283 + $0xd8] sm:$0xf] %vm1380, %v1306
      %1436 = vst.msk [vmem:[%s283 + $0xdc] sm:$0xf] %vm1380, %v1307
      %1437 = vst.msk [vmem:[%s283 + $0xe0] sm:$0xf] %vm1380, %v1308
      %1438 = vst.msk [vmem:[%s283 + $0xe4] sm:$0xf] %vm1380, %v1309
      %1439 = vst.msk [vmem:[%s283 + $0xe8] sm:$0xf] %vm1380, %v1310
      %1440 = vst.msk [vmem:[%s283 + $0xec] sm:$0xf] %vm1380, %v1311
      %1441 = vst.msk [vmem:[%s283 + $0xf0] sm:$0xf] %vm1380, %v1312
      %1442 = vst.msk [vmem:[%s283 + $0xf4] sm:$0xf] %vm1380, %v1313
      %1443 = vst.msk [vmem:[%s283 + $0xf8] sm:$0xf] %vm1380, %v1314
      %1444 = vst.msk [vmem:[%s283 + $0xfc] sm:$0xf] %vm1380, %v1315
      %s1445 = smul.u32 64, %s20
      %p1446 = scmp.lt.s32.totalorder %s19, 0
      %s1447 = scalar_select %p1446, %s19, 0
      %p1448 = scmp.lt.s32.totalorder %s1445, 255
      %s1449 = scalar_select %p1448, %s1445, 255
      %s1450 = smul.addr %s1447, 256
      %s1451 = sadd.s32 %s1449, %s1450
      %s1452 = smul.addr %s1451, 4
      %s1453 = scalar_lea.vmem %s4, %s1452
      // Predicated region
      $region37: #{fused_matmul.1} parent=35 // pred_check
        %p1454 = pneg %p153
      $region38: #{fused_matmul.1} parent=35 // pred_check_branch
        %1456 = sbr.rel (%p1454) target = $region40
      $region39: #{fused_matmul.1} parent=35 // pred_region
        %s1457 = smul.u32 64, %s20
      $region40: #{fused_matmul.1} parent=35 // pred_fallthru
        _
    $region36: #{fused_matmul.1} parent=5 // pred_fallthru
      _
    %p1458 = scmp.le.s32.totalorder 2, %s10
    // Predicated region
    $region41: #{fused_matmul.1} parent=5 // pred_check
      %p1459 = pneg %p1458
    $region42: #{fused_matmul.1} parent=5 // pred_check_branch
      %1461 = sbr.rel (%p1459) target = $region44
    $region43: #{fused_matmul.1} parent=5 // pred_region
      %s1462 = ssub.s32 %s10, 2
      // Predicated region
      $region45: #{fused_matmul.1} parent=43 // pred_check
        %p1463 = pneg %p159
      $region46: #{fused_matmul.1} parent=43 // pred_check_branch
        %1465 = sbr.rel (%p1463) target = $region48
      $region47: #{fused_matmul.1} parent=43 // pred_region
        %s1466 = smul.u32 64, %s22
        %p1467 = scmp.lt.s32.totalorder %s21, 0
        %s1468 = scalar_select %p1467, %s21, 0
        %p1469 = scmp.lt.s32.totalorder %s1466, 255
        %s1470 = scalar_select %p1469, %s1466, 255
        %s1471 = smul.addr %s1468, 256
        %s1472 = sadd.s32 %s1470, %s1471
        %s1473 = smul.addr %s1472, 4
        %s1474 = scalar_lea.vmem %s4, %s1473
      $region48: #{fused_matmul.1} parent=43 // pred_fallthru
        _
    $region44: #{fused_matmul.1} parent=5 // pred_fallthru
      _
  $region6: #{fused_matmul.1} parent=0 // loop_footer
    %s14 = sadd.s32 1, %s10
  $region7: #{fused_matmul.1} parent=0 // loop_footer_branch
    %9 = sbr.rel target = $region3
  $region8: #{fused_matmul.1} parent=0 // loop_exit
    _

</llo_original>
